<compile_context>
chip_gen: v6e
topology: v6e:2x2x1
jax: 0.10.0
libtpu: 0.0.40
codegen_flags: <defaults>
</compile_context>

<pallas_src>
import functools
import math

import jax
import jax.numpy as jnp
from jax import lax
from jax.experimental import pallas as pl
from jax.experimental.pallas import tpu as pltpu

PAD = 0  # Offsets.PAD


def _round_up(x, m):
    return ((x + m - 1) // m) * m


def _interleave_gates(wf, wb, H):
    """Map two per-direction blocks with PyTorch gate column order (i, f, g, o)
    into the fused layout [i_f, i_b, f_f, f_b, o_f, o_b, g_f, g_b]."""
    i_f, f_f, g_f, o_f = (wf[:, k * H:(k + 1) * H] for k in range(4))
    i_b, f_b, g_b, o_b = (wb[:, k * H:(k + 1) * H] for k in range(4))
    return jnp.concatenate([i_f, i_b, f_f, f_b, o_f, o_b, g_f, g_b], axis=1)


# ---------------------------------------------------------------------------
# Pallas kernel
# ---------------------------------------------------------------------------
def _char_lstm_kernel(maxlen_ref, ids_ref, len_ref, pf_ref, pb_ref, whh_ref,
                      out_ref, gf_scr, gb_scr, m_scr, *, hidden):
    W = ids_ref.shape[0]          # chars per word (time steps)
    Nb = ids_ref.shape[1]         # words in this block
    H = hidden
    H2 = 2 * H                    # fwd+bwd state width
    H8 = 8 * H                    # fused gate width
    vsz = pf_ref.shape[0]

    max_len = maxlen_ref[pl.program_id(0)]          # per-block max word length

    # --- prologue 1: fused embedding lookup + input projection (batched MXU).
    # pf/pb already contain  emb_table @ W_ih + b  reordered into the fused
    # gate layout, so a one-hot matmul gives the per-char input gates directly.
    ids = ids_ref[...].reshape(W * Nb, 1)                         # int32
    vocab = lax.broadcasted_iota(jnp.int32, (W * Nb, vsz), 1)
    onehot = (ids == vocab).astype(jnp.float32)                   # (W*Nb, vsz)
    gf_scr[...] = jnp.dot(onehot, pf_ref[...],
                          preferred_element_type=jnp.float32).reshape(W, Nb, H8)
    gb_scr[...] = jnp.dot(onehot, pb_ref[...],
                          preferred_element_type=jnp.float32).reshape(W, Nb, H8)

    # --- prologue 2: per-step update masks for both directions (hoisted).
    lengths = len_ref[...].reshape(1, Nb, 1)                      # int32
    step = lax.broadcasted_iota(jnp.int32, (W, Nb, H), 0)
    m_f = (step < lengths).astype(jnp.float32)                    # fwd char pos == step
    m_b = ((max_len - 1 - step) < lengths).astype(jnp.float32)    # bwd char pos == max_len-1-step
    m_scr[...] = jnp.concatenate([m_f, m_b], axis=-1)             # (W, Nb, 2H)

    whh = whh_ref[...]            # (2H, 8H) block-diagonal over directions

    # --- recurrence: only h @ W_hh + elementwise cell math on the serial path.
    def body(s, carry):
        h, c = carry                                      # (Nb, 2H): [fwd | bwd]
        gin = gf_scr[s] + gb_scr[max_len - 1 - s]         # (Nb, 8H) input gates
        gates = gin + jnp.dot(h, whh, preferred_element_type=jnp.float32)
        sg = jax.nn.sigmoid(gates)                        # one full-width EUP op
        g = jnp.tanh(gates[:, 3 * H2:])                   # cell candidate, both dirs
        i = sg[:, 0:H2]
        f = sg[:, H2:2 * H2]
        o = sg[:, 2 * H2:3 * H2]
        c_new = f * c + i * g
        h_new = o * jnp.tanh(c_new)
        m = m_scr[s]                                      # {0,1} f32, (Nb, 2H)
        return h + m * (h_new - h), c + m * (c_new - c)

    z = jnp.zeros((Nb, H2), jnp.float32)
    h, _ = lax.fori_loop(0, max_len, body, (z, z))

    # h already is [h_fwd | h_bwd]: lane-dense store, no concat needed.
    out_ref[...] = h.astype(out_ref.dtype)


# ---------------------------------------------------------------------------
# Wrapper
# ---------------------------------------------------------------------------
def char_lstm_embeddings(xch, params, *, lstmsz, block_n=None):
    B, T, W = xch.shape
    N = B * T
    H = lstmsz // 2
    emb_table = params["embedding"].astype(jnp.float32)
    vsz = emb_table.shape[0]

    flat = xch.reshape(N, W).astype(jnp.int32)
    lengths = jnp.maximum(jnp.sum(flat != PAD, axis=1), 1).astype(jnp.int32)

    # Pre-compose embedding table with input projections + biases, reordered
    # into the fused gate layout (tiny host-side matmuls, done once per call).
    pf_in = jnp.dot(emb_table, params["wih_f"]) + params["b_f"]   # (vsz, 4H)
    pb_in = jnp.dot(emb_table, params["wih_b"]) + params["b_b"]
    p_fwd = _interleave_gates(pf_in, jnp.zeros_like(pb_in), H).astype(jnp.float32)
    p_bwd = _interleave_gates(jnp.zeros_like(pf_in), pb_in, H).astype(jnp.float32)

    zh = jnp.zeros((H, 4 * H), jnp.float32)
    whh_comb = _interleave_gates(
        jnp.concatenate([params["whh_f"], zh], axis=0),
        jnp.concatenate([zh, params["whh_b"]], axis=0), H).astype(jnp.float32)

    # Tiling over words.  block_n only needs to be a multiple of 8.
    if block_n is None:
        block_n = 256
    block_n = min(_round_up(N, 8), _round_up(block_n, 8))
    N_pad = _round_up(N, block_n)
    num_blocks = N_pad // block_n

    ids = jnp.full((N_pad, W), PAD, jnp.int32).at[:N].set(flat)
    lens = jnp.ones((N_pad,), jnp.int32).at[:N].set(lengths)   # pad rows: len 1
    ids_tm = ids.T.reshape(W, N_pad, 1)                        # time-major ids
    lens_2d = lens.reshape(N_pad, 1)
    max_len = lens.reshape(num_blocks, block_n).max(axis=1).astype(jnp.int32)

    kernel = functools.partial(_char_lstm_kernel, hidden=H)

    out = pl.pallas_call(
        kernel,
        out_shape=jax.ShapeDtypeStruct((N_pad, 2 * H), jnp.float32),
        grid_spec=pltpu.PrefetchScalarGridSpec(
            num_scalar_prefetch=1,                     # per-block max length
            grid=(num_blocks,),
            in_specs=[
                pl.BlockSpec((W, block_n, 1), lambda i, ml: (0, i, 0)),   # char ids
                pl.BlockSpec((block_n, 1), lambda i, ml: (i, 0)),         # lengths
                pl.BlockSpec((vsz, 8 * H), lambda i, ml: (0, 0)),         # fused fwd proj
                pl.BlockSpec((vsz, 8 * H), lambda i, ml: (0, 0)),         # fused bwd proj
                pl.BlockSpec((2 * H, 8 * H), lambda i, ml: (0, 0)),       # fused W_hh
            ],
            out_specs=pl.BlockSpec((block_n, 2 * H), lambda i, ml: (i, 0)),
            scratch_shapes=[
                pltpu.VMEM((W, block_n, 8 * H), jnp.float32),   # fwd input gates
                pltpu.VMEM((W, block_n, 8 * H), jnp.float32),   # bwd input gates
                pltpu.VMEM((W, block_n, 2 * H), jnp.float32),   # update masks
            ],
        ),
        compiler_params=pltpu.CompilerParams(
            dimension_semantics=("parallel",),
            vmem_limit_bytes=64 * 1024 * 1024,
        ),
    )(max_len, ids_tm, lens_2d, p_fwd, p_bwd, whh_comb)

    return out[:N].reshape(B, T, lstmsz)


# ---------------------------------------------------------------------------
# Deterministic parameter init (mimics nn.Embedding + nn.LSTM default init).
# ---------------------------------------------------------------------------
def init_params(key, vsz, dsz, lstmsz):
    H = lstmsz // 2
    ks = jax.random.split(key, 9)
    emb = 0.1 * jax.random.normal(ks[0], (vsz, dsz), jnp.float32)
    emb = emb.at[PAD].set(0.0)            # padding_idx -> zero row

    bound = 1.0 / math.sqrt(H)
    u = lambda k, s: jax.random.uniform(k, s, jnp.float32, -bound, bound)

    # PyTorch stores weight_ih (4H, dsz) / weight_hh (4H, H) and two biases;
    # we keep them pre-transposed for x @ W (gate col order i,f,g,o) and fold
    # the two biases together.
    return dict(
        embedding=emb,
        wih_f=u(ks[1], (dsz, 4 * H)),
        whh_f=u(ks[2], (H, 4 * H)),
        b_f=u(ks[3], (1, 4 * H)) + u(ks[4], (1, 4 * H)),
        wih_b=u(ks[5], (dsz, 4 * H)),
        whh_b=u(ks[6], (H, 4 * H)),
        b_b=u(ks[7], (1, 4 * H)) + u(ks[8], (1, 4 * H)),
    )


# ---------------------------------------------------------------------------
# Pure-JAX reference (same math, no Pallas) for a correctness check.
# ---------------------------------------------------------------------------
def reference(xch, params, lstmsz):
    B, T, W = xch.shape
    N = B * T
    H = lstmsz // 2
    flat = xch.reshape(N, W)
    emb = jnp.take(params["embedding"], flat, axis=0)
    lengths = jnp.maximum(jnp.sum(flat != PAD, axis=1), 1)

    def cell(x, h, c, wih, whh, b):
        gates = x @ wih + h @ whh + b
        i = jax.nn.sigmoid(gates[:, :H])
        f = jax.nn.sigmoid(gates[:, H:2 * H])
        g = jnp.tanh(gates[:, 2 * H:3 * H])
        o = jax.nn.sigmoid(gates[:, 3 * H:])
        c2 = f * c + i * g
        return o * jnp.tanh(c2), c2

    z = jnp.zeros((N, H), jnp.float32)
    h_f = c_f = h_b = c_b = z
    for t in range(W):
        hn, cn = cell(emb[:, t], h_f, c_f, params["wih_f"], params["whh_f"], params["b_f"])
        m = (t < lengths)[:, None]
        h_f = jnp.where(m, hn, h_f); c_f = jnp.where(m, cn, c_f)
        tb = W - 1 - t
        hn, cn = cell(emb[:, tb], h_b, c_b, params["wih_b"], params["whh_b"], params["b_b"])
        m = (tb < lengths)[:, None]
        h_b = jnp.where(m, hn, h_b); c_b = jnp.where(m, cn, c_b)
    return jnp.concatenate([h_f, h_b], axis=-1).reshape(B, T, lstmsz)


if __name__ == "__main__":
    B, T, W = 2, 8, 16              # batch, words per sentence, chars per word
    vsz, dsz, lstmsz = 64, 32, 64   # char vocab, char emb dim, output (2*H)

    key = jax.random.PRNGKey(0)
    k_par, k_x = jax.random.split(key)
    params = init_params(k_par, vsz, dsz, lstmsz)

    xch = jax.random.randint(k_x, (B, T, W), 0, vsz, dtype=jnp.int32)
    # exercise padding / variable-length paths: pad some tails and one full word
    xch = xch.at[:, :, W // 2:].set(jnp.where(xch[:, :, W // 2:] % 3 == 0, 0, xch[:, :, W // 2:]))
    xch = xch.at[0, 0, :].set(0)     # all-PAD word (length clamped to 1)

    out = char_lstm_embeddings(xch, params, lstmsz=lstmsz)
    out = jax.block_until_ready(out)

    ref = reference(xch, params, lstmsz)
    assert out.shape == (B, T, lstmsz), out.shape
    # Tolerance covers MXU mixed-precision passes: kernel pre-composes the
    # embedding with W_ih while the reference multiplies per step, so roundings
    # differ at bf16-pass level; real bugs show up as O(0.1) errors.
    err = float(jnp.max(jnp.abs(out - ref)))
    assert jnp.allclose(out, ref, rtol=5e-3, atol=5e-3), err

    print("KERNEL_OK")
</pallas_src>

<mosaic_0001>
module attributes {stable_mosaic.version = 11 : i64} {
  func.func @_char_lstm_kernel(%arg0: i32, %arg1: memref<1xi32, #tpu.memory_space<smem>>, %arg2: memref<16x16x1xi32, #tpu.memory_space<vmem>>, %arg3: memref<16x1xi32, #tpu.memory_space<vmem>>, %arg4: memref<64x256xf32, #tpu.memory_space<vmem>>, %arg5: memref<64x256xf32, #tpu.memory_space<vmem>>, %arg6: memref<64x256xf32, #tpu.memory_space<vmem>>, %arg7: memref<16x64xf32, #tpu.memory_space<vmem>>, %arg8: memref<16x16x256xf32, #tpu.memory_space<vmem>>, %arg9: memref<16x16x256xf32, #tpu.memory_space<vmem>>, %arg10: memref<16x16x64xf32, #tpu.memory_space<vmem>>) attributes {dimension_semantics = [#tpu.dimension_semantics<parallel>], iteration_bounds = array<i64: 1>, scalar_prefetch = 1 : i64, scratch_operands = 3 : i64, tpu.core_type = #tpu.core_type<tc>, window_params = [{transform_indices = @transform_0, window_bounds = array<i64: 16, 16, 1>}, {transform_indices = @transform_1, window_bounds = array<i64: 16, 1>}, {pipeline_mode = #tpu.pipeline_mode<synchronous>, transform_indices = @transform_2, window_bounds = array<i64: 64, 256>}, {pipeline_mode = #tpu.pipeline_mode<synchronous>, transform_indices = @transform_3, window_bounds = array<i64: 64, 256>}, {pipeline_mode = #tpu.pipeline_mode<synchronous>, transform_indices = @transform_4, window_bounds = array<i64: 64, 256>}, {transform_indices = @transform_5, window_bounds = array<i64: 16, 64>}]} {
    %0 = arith.index_cast %arg0 : i32 to index
    %1 = memref.load %arg1[%0] : memref<1xi32, #tpu.memory_space<smem>>
    %c0 = arith.constant 0 : index
    %c0_0 = arith.constant 0 : index
    %c0_1 = arith.constant 0 : index
    %2 = vector.load %arg2[%c0, %c0_0, %c0_1] : memref<16x16x1xi32, #tpu.memory_space<vmem>>, vector<16x16x1xi32>
    %3 = vector.shape_cast %2 : vector<16x16x1xi32> to vector<256x1xi32>
    %4 = tpu.iota {dimensions = array<i32: 1>} : vector<256x64xi32>
    %5 = vector.broadcast %3 : vector<256x1xi32> to vector<256x64xi32>
    %6 = arith.cmpi eq, %5, %4 : vector<256x64xi32>
    %7 = arith.extui %6 : vector<256x64xi1> to vector<256x64xi32>
    %8 = arith.sitofp %7 : vector<256x64xi32> to vector<256x64xf32>
    %c0_2 = arith.constant 0 : index
    %c0_3 = arith.constant 0 : index
    %9 = vector.load %arg4[%c0_2, %c0_3] : memref<64x256xf32, #tpu.memory_space<vmem>>, vector<64x256xf32>
    %cst = arith.constant dense<0.000000e+00> : vector<256x256xf32>
    %10 = tpu.matmul %8, %9, %cst {dimension_numbers = #tpu.dot_dimension_numbers<[1], [0], [0], [1], [0, 0, 1, 1], [], []>} : vector<256x64xf32>, vector<64x256xf32>, vector<256x256xf32> -> vector<256x256xf32>
    %11 = vector.shape_cast %10 : vector<256x256xf32> to vector<16x16x256xf32>
    %c0_4 = arith.constant 0 : index
    %c0_5 = arith.constant 0 : index
    %c0_6 = arith.constant 0 : index
    %12 = vector.load %arg8[%c0_4, %c0_5, %c0_6] : memref<16x16x256xf32, #tpu.memory_space<vmem>>, vector<16x16x256xf32>
    tpu.vector_store %arg8[%c0_4, %c0_5, %c0_6], %11 {strides = array<i32>} : memref<16x16x256xf32, #tpu.memory_space<vmem>>, vector<16x16x256xf32>,
    %c0_7 = arith.constant 0 : index
    %c0_8 = arith.constant 0 : index
    %13 = vector.load %arg5[%c0_7, %c0_8] : memref<64x256xf32, #tpu.memory_space<vmem>>, vector<64x256xf32>
    %cst_9 = arith.constant dense<0.000000e+00> : vector<256x256xf32>
    %14 = tpu.matmul %8, %13, %cst_9 {dimension_numbers = #tpu.dot_dimension_numbers<[1], [0], [0], [1], [0, 0, 1, 1], [], []>} : vector<256x64xf32>, vector<64x256xf32>, vector<256x256xf32> -> vector<256x256xf32>
    %15 = vector.shape_cast %14 : vector<256x256xf32> to vector<16x16x256xf32>
    %c0_10 = arith.constant 0 : index
    %c0_11 = arith.constant 0 : index
    %c0_12 = arith.constant 0 : index
    %16 = vector.load %arg9[%c0_10, %c0_11, %c0_12] : memref<16x16x256xf32, #tpu.memory_space<vmem>>, vector<16x16x256xf32>
    tpu.vector_store %arg9[%c0_10, %c0_11, %c0_12], %15 {strides = array<i32>} : memref<16x16x256xf32, #tpu.memory_space<vmem>>, vector<16x16x256xf32>,
    %c0_13 = arith.constant 0 : index
    %c0_14 = arith.constant 0 : index
    %17 = vector.load %arg3[%c0_13, %c0_14] : memref<16x1xi32, #tpu.memory_space<vmem>>, vector<16x1xi32>
    %18 = vector.shape_cast %17 : vector<16x1xi32> to vector<1x16x1xi32>
    %19 = tpu.iota {dimensions = array<i32: 0>} : vector<16x16x32xi32>
    %20 = vector.broadcast %18 : vector<1x16x1xi32> to vector<16x16x32xi32>
    %21 = arith.cmpi slt, %19, %20 : vector<16x16x32xi32>
    %22 = arith.extui %21 : vector<16x16x32xi1> to vector<16x16x32xi32>
    %23 = arith.sitofp %22 : vector<16x16x32xi32> to vector<16x16x32xf32>
    %c1_i32 = arith.constant 1 : i32
    %24 = arith.subi %1, %c1_i32 : i32
    %25 = vector.broadcast %24 : i32 to vector<16x16x32xi32>
    %26 = arith.subi %25, %19 : vector<16x16x32xi32>
    %27 = vector.broadcast %18 : vector<1x16x1xi32> to vector<16x16x32xi32>
    %28 = arith.cmpi slt, %26, %27 : vector<16x16x32xi32>
    %29 = arith.extui %28 : vector<16x16x32xi1> to vector<16x16x32xi32>
    %30 = arith.sitofp %29 : vector<16x16x32xi32> to vector<16x16x32xf32>
    %31 = tpu.concatenate %23, %30 in 2 : vector<16x16x32xf32>, vector<16x16x32xf32> -> vector<16x16x64xf32>
    %c0_15 = arith.constant 0 : index
    %c0_16 = arith.constant 0 : index
    %c0_17 = arith.constant 0 : index
    %32 = vector.load %arg10[%c0_15, %c0_16, %c0_17] : memref<16x16x64xf32, #tpu.memory_space<vmem>>, vector<16x16x64xf32>
    tpu.vector_store %arg10[%c0_15, %c0_16, %c0_17], %31 {strides = array<i32>} : memref<16x16x64xf32, #tpu.memory_space<vmem>>, vector<16x16x64xf32>,
    %c0_18 = arith.constant 0 : index
    %c0_19 = arith.constant 0 : index
    %33 = vector.load %arg6[%c0_18, %c0_19] : memref<64x256xf32, #tpu.memory_space<vmem>>, vector<64x256xf32>
    %cst_20 = arith.constant 0.000000e+00 : f32
    %34 = vector.broadcast %cst_20 : f32 to vector<16x64xf32>
    %c0_i32 = arith.constant 0 : i32
    %35 = arith.subi %1, %c0_i32 : i32
    %36 = arith.addi %c0_i32, %35 : i32
    %c1_i32_21 = arith.constant 1 : i32
    %37:2 = scf.for %arg11 = %c0_i32 to %36 step %c1_i32_21 iter_args(%arg12 = %34, %arg13 = %34) -> (vector<16x64xf32>, vector<16x64xf32>)  : i32 {
      %39 = arith.index_cast %arg11 : i32 to index
      %c0_24 = arith.constant 0 : index
      %c0_25 = arith.constant 0 : index
      %40 = vector.load %arg8[%39, %c0_24, %c0_25] : memref<16x16x256xf32, #tpu.memory_space<vmem>>, vector<1x16x256xf32>
      %41 = vector.shape_cast %40 : vector<1x16x256xf32> to vector<16x256xf32>
      %c1_i32_26 = arith.constant 1 : i32
      %42 = arith.subi %1, %c1_i32_26 : i32
      %43 = arith.subi %42, %arg11 : i32
      %44 = arith.index_cast %43 : i32 to index
      %c0_27 = arith.constant 0 : index
      %c0_28 = arith.constant 0 : index
      %45 = vector.load %arg9[%44, %c0_27, %c0_28] : memref<16x16x256xf32, #tpu.memory_space<vmem>>, vector<1x16x256xf32>
      %46 = vector.shape_cast %45 : vector<1x16x256xf32> to vector<16x256xf32>
      %47 = arith.addf %41, %46 : vector<16x256xf32>
      %cst_29 = arith.constant dense<0.000000e+00> : vector<16x256xf32>
      %48 = tpu.matmul %arg12, %33, %cst_29 {dimension_numbers = #tpu.dot_dimension_numbers<[1], [0], [0], [1], [0, 0, 1, 1], [], []>} : vector<16x64xf32>, vector<64x256xf32>, vector<16x256xf32> -> vector<16x256xf32>
      %49 = arith.addf %47, %48 : vector<16x256xf32>
      %50 = arith.negf %49 : vector<16x256xf32>
      %51 = math.exp %50 : vector<16x256xf32>
      %cst_30 = arith.constant 1.000000e+00 : f32
      %52 = vector.broadcast %cst_30 : f32 to vector<16x256xf32>
      %53 = arith.addf %52, %51 : vector<16x256xf32>
      %54 = arith.divf %52, %53 : vector<16x256xf32>
      %55 = vector.extract_strided_slice %49 {offsets = [0, 192], sizes = [16, 64], strides = [1, 1]} : vector<16x256xf32> to vector<16x64xf32>
      %56 = math.tanh %55 : vector<16x64xf32>
      %57 = vector.extract_strided_slice %54 {offsets = [0, 0], sizes = [16, 64], strides = [1, 1]} : vector<16x256xf32> to vector<16x64xf32>
      %58 = vector.extract_strided_slice %54 {offsets = [0, 64], sizes = [16, 64], strides = [1, 1]} : vector<16x256xf32> to vector<16x64xf32>
      %59 = vector.extract_strided_slice %54 {offsets = [0, 128], sizes = [16, 64], strides = [1, 1]} : vector<16x256xf32> to vector<16x64xf32>
      %60 = arith.mulf %58, %arg13 : vector<16x64xf32>
      %61 = arith.mulf %57, %56 : vector<16x64xf32>
      %62 = arith.addf %60, %61 : vector<16x64xf32>
      %63 = math.tanh %62 : vector<16x64xf32>
      %64 = arith.mulf %59, %63 : vector<16x64xf32>
      %65 = arith.index_cast %arg11 : i32 to index
      %c0_31 = arith.constant 0 : index
      %c0_32 = arith.constant 0 : index
      %66 = vector.load %arg10[%65, %c0_31, %c0_32] : memref<16x16x64xf32, #tpu.memory_space<vmem>>, vector<1x16x64xf32>
      %67 = vector.shape_cast %66 : vector<1x16x64xf32> to vector<16x64xf32>
      %68 = arith.subf %64, %arg12 : vector<16x64xf32>
      %69 = arith.mulf %67, %68 : vector<16x64xf32>
      %70 = arith.addf %arg12, %69 : vector<16x64xf32>
      %71 = arith.subf %62, %arg13 : vector<16x64xf32>
      %72 = arith.mulf %67, %71 : vector<16x64xf32>
      %73 = arith.addf %arg13, %72 : vector<16x64xf32>
      scf.yield %70, %73 : vector<16x64xf32>, vector<16x64xf32>
    }
    %c0_22 = arith.constant 0 : index
    %c0_23 = arith.constant 0 : index
    %38 = vector.load %arg7[%c0_22, %c0_23] : memref<16x64xf32, #tpu.memory_space<vmem>>, vector<16x64xf32>
    tpu.vector_store %arg7[%c0_22, %c0_23], %37#0 {strides = array<i32>} : memref<16x64xf32, #tpu.memory_space<vmem>>, vector<16x64xf32>,
    return
  }
  func.func @transform_0(%arg0: i32, %arg1: memref<1xi32, #tpu.memory_space<smem>>) -> (i32, i32, i32) {
    %c0_i32 = arith.constant 0 : i32
    %c0_i32_0 = arith.constant 0 : i32
    %c0_i32_1 = arith.constant 0 : i32
    return %c0_i32, %arg0, %c0_i32_0 : i32, i32, i32
  }
  func.func @transform_1(%arg0: i32, %arg1: memref<1xi32, #tpu.memory_space<smem>>) -> (i32, i32) {
    %c0_i32 = arith.constant 0 : i32
    %c0_i32_0 = arith.constant 0 : i32
    return %arg0, %c0_i32 : i32, i32
  }
  func.func @transform_2(%arg0: i32, %arg1: memref<1xi32, #tpu.memory_space<smem>>) -> (i32, i32) {
    %c0_i32 = arith.constant 0 : i32
    %c0_i32_0 = arith.constant 0 : i32
    %c0_i32_1 = arith.constant 0 : i32
    return %c0_i32, %c0_i32_0 : i32, i32
  }
  func.func @transform_3(%arg0: i32, %arg1: memref<1xi32, #tpu.memory_space<smem>>) -> (i32, i32) {
    %c0_i32 = arith.constant 0 : i32
    %c0_i32_0 = arith.constant 0 : i32
    %c0_i32_1 = arith.constant 0 : i32
    return %c0_i32, %c0_i32_0 : i32, i32
  }
  func.func @transform_4(%arg0: i32, %arg1: memref<1xi32, #tpu.memory_space<smem>>) -> (i32, i32) {
    %c0_i32 = arith.constant 0 : i32
    %c0_i32_0 = arith.constant 0 : i32
    %c0_i32_1 = arith.constant 0 : i32
    return %c0_i32, %c0_i32_0 : i32, i32
  }
  func.func @transform_5(%arg0: i32, %arg1: memref<1xi32, #tpu.memory_space<smem>>) -> (i32, i32) {
    %c0_i32 = arith.constant 0 : i32
    %c0_i32_0 = arith.constant 0 : i32
    return %arg0, %c0_i32 : i32, i32
  }
}

</mosaic_0001>

<llo_original>
// kernel: tpu_custom_call.1
$region0: #{tpu_custom_call.1}
  #allocation0 [shape = 'u32[]', space=smem, size = 0x4, offset = 0x4, fixed_abs, tag = 'smem constant byte address 0x4 - core index']
  #allocation1 [shape = 'u32[144,128]{1,0:T(1,128)}', space=vmem, size = 0x12000, scoped, tag = 'internal scratch']
  #allocation2 [shape = 'f32[16,16,256]{2,1,0:T(8,128)}', space=vmem, size = 0x40000, scoped, tag = 'scratch operand']
  #allocation3 [shape = 'f32[16,16,256]{2,1,0:T(8,128)}', space=vmem, size = 0x40000, scoped, tag = 'scratch operand']
  #allocation4 [shape = 'f32[16,16,64]{2,1,0:T(8,128)}', space=vmem, size = 0x20000, scoped, tag = 'scratch operand']
  #allocation5 [shape = 's32[1]{0}', space=sflag, size = 0x4, scoped, tag = 'scoped memory for tpu_custom_call.1']
  #allocation6 [shape = 's32[1]{0:T(128)S(6)}', space=smem, size = 0x200, scoped, tag = 'prefetched SMEM operand 0']
  %s0 = inlined_call_operand.<no memory space> [shape: s32[1], index: 0, kind: input, shape index: {}]
  %s1 = inlined_call_operand.vmem [shape: s32[16,16,1], index: 1, kind: input, shape index: {}]
  %s2 = inlined_call_operand.vmem [shape: s32[16,1], index: 2, kind: input, shape index: {}]
  %s3 = inlined_call_operand.vmem [shape: f32[64,256], index: 3, kind: input, shape index: {}]
  %s4 = inlined_call_operand.vmem [shape: f32[64,256], index: 4, kind: input, shape index: {}]
  %s5 = inlined_call_operand.hbm [shape: f32[64,256], index: 5, kind: input, shape index: {}]
  %s6 = inlined_call_operand.hbm [shape: f32[16,64], index: 6, kind: output, shape index: {}]
  %s7 = sld [smem:[#allocation0]]
  $region41: #{tpu_custom_call.1} parent=0
    _
  %s9 = ssub.s32 1, %s7
  %s10 = scalar_select 0, %s9, %s7
  %11 = sst [smem:[#allocation6]] %s0
  $region1: #{tpu_custom_call.1} parent=0
    #allocation7 [shape = 'u8[65536]{0}', space=vmem, size = 0x10000, scoped, tag = 'input window, operand 5, single buffered']
    #allocation8 [shape = 's32[1]{0}', space=sflag, size = 0x4, scoped, tag = 'scoped memory for tpu_custom_call.1']
    #allocation9 [shape = 's32[1]{0}', space=sflag, size = 0x4, scoped, tag = 'scoped memory for tpu_custom_call.1']
    #allocation10 [shape = 'u8[8192]{0}', space=vmem, size = 0x2000, scoped, tag = 'output window, operand 0, single buffered']
    %12 = vsyncpa [#allocation8], 0
    %13 = vsyncpa [#allocation9], 0
    // Predicated region
    $region2: #{tpu_custom_call.1} parent=1 // pred_check
      _
    $region3: #{tpu_custom_call.1} parent=1 // pred_check_branch
      %15 = sbr.rel (0) target = $region5
    $region4: #{tpu_custom_call.1} parent=1 // pred_region
      _
    $region5: #{tpu_custom_call.1} parent=1 // pred_fallthru
      _
    // Predicated region
    $region6: #{tpu_custom_call.1} parent=1 // pred_check
      _
    $region7: #{tpu_custom_call.1} parent=1 // pred_check_branch
      %17 = sbr.rel (0) target = $region9
    $region8: #{tpu_custom_call.1} parent=1 // pred_region
      _
    $region9: #{tpu_custom_call.1} parent=1 // pred_fallthru
      _
    // Predicated region
    $region10: #{tpu_custom_call.1} parent=1 // pred_check
      _
    $region11: #{tpu_custom_call.1} parent=1 // pred_check_branch
      %19 = sbr.rel (0) target = $region13
    $region12: #{tpu_custom_call.1} parent=1 // pred_region
      _
    $region13: #{tpu_custom_call.1} parent=1 // pred_fallthru
      _
    // Predicated region
    $region14: #{tpu_custom_call.1} parent=1 // pred_check
      _
    $region15: #{tpu_custom_call.1} parent=1 // pred_check_branch
      %21 = sbr.rel (0) target = $region17
    $region16: #{tpu_custom_call.1} parent=1 // pred_region
      _
    $region17: #{tpu_custom_call.1} parent=1 // pred_fallthru
      _
    // Predicated region
    $region18: #{tpu_custom_call.1} parent=1 // pred_check
      _
    $region19: #{tpu_custom_call.1} parent=1 // pred_check_branch
      %23 = sbr.rel (0) target = $region21
    $region20: #{tpu_custom_call.1} parent=1 // pred_region
      %s25 = ssub.s32 2048, 2048
      %26 = vsyncadd [#allocation8], %s25
      %s27 = sshll.u32 [#allocation7], 4
      %s28 = int_to_ptr.vmem [resolvable:$true] %s27
      %33 = dma.hbm_to_vmem [thread:$0]  %s5, 2048, %s28, [#allocation8], 256, 256, 16
    $region21: #{tpu_custom_call.1} parent=1 // pred_fallthru
      _
    // Predicated region
    $region22: #{tpu_custom_call.1} parent=1 // pred_check
      _
    $region23: #{tpu_custom_call.1} parent=1 // pred_check_branch
      %35 = sbr.rel (0) target = $region25
    $region24: #{tpu_custom_call.1} parent=1 // pred_region
      %36 = dma.done [#allocation8], 2048
    $region25: #{tpu_custom_call.1} parent=1 // pred_fallthru
      _
    %s37 = sld [smem:[#allocation6]]
    %v38 = vld [vmem:[%s1] sm:$0xff]
    %v39 = vld [vmem:[%s1 + $0x8] sm:$0xff]
    %v40 = vld [vmem:[%s1 + $0x10] sm:$0xff]
    %v41 = vld [vmem:[%s1 + $0x18] sm:$0xff]
    %v42 = vld [vmem:[%s1 + $0x20] sm:$0xff]
    %v43 = vld [vmem:[%s1 + $0x28] sm:$0xff]
    %v44 = vld [vmem:[%s1 + $0x30] sm:$0xff]
    %v45 = vld [vmem:[%s1 + $0x38] sm:$0xff]
    %v46 = vld [vmem:[%s1 + $0x40] sm:$0xff]
    %v47 = vld [vmem:[%s1 + $0x48] sm:$0xff]
    %v48 = vld [vmem:[%s1 + $0x50] sm:$0xff]
    %v49 = vld [vmem:[%s1 + $0x58] sm:$0xff]
    %v50 = vld [vmem:[%s1 + $0x60] sm:$0xff]
    %v51 = vld [vmem:[%s1 + $0x68] sm:$0xff]
    %v52 = vld [vmem:[%s1 + $0x70] sm:$0xff]
    %v53 = vld [vmem:[%s1 + $0x78] sm:$0xff]
    %v54 = vld [vmem:[%s1 + $0x80] sm:$0xff]
    %v55 = vld [vmem:[%s1 + $0x88] sm:$0xff]
    %v56 = vld [vmem:[%s1 + $0x90] sm:$0xff]
    %v57 = vld [vmem:[%s1 + $0x98] sm:$0xff]
    %v58 = vld [vmem:[%s1 + $0xa0] sm:$0xff]
    %v59 = vld [vmem:[%s1 + $0xa8] sm:$0xff]
    %v60 = vld [vmem:[%s1 + $0xb0] sm:$0xff]
    %v61 = vld [vmem:[%s1 + $0xb8] sm:$0xff]
    %v62 = vld [vmem:[%s1 + $0xc0] sm:$0xff]
    %v63 = vld [vmem:[%s1 + $0xc8] sm:$0xff]
    %v64 = vld [vmem:[%s1 + $0xd0] sm:$0xff]
    %v65 = vld [vmem:[%s1 + $0xd8] sm:$0xff]
    %v66 = vld [vmem:[%s1 + $0xe0] sm:$0xff]
    %v67 = vld [vmem:[%s1 + $0xe8] sm:$0xff]
    %v68 = vld [vmem:[%s1 + $0xf0] sm:$0xff]
    %v69 = vld [vmem:[%s1 + $0xf8] sm:$0xff]
    %v70 = vlaneseq
    %v71 = vand.u32 %v70, 127
    %72 = vset.pattern.permute.xlu0 0
    %73 = vperm.xlu0 %72, %v38
    %v74 = vpop.permute.xlu0 %73
    %75 = vset.pattern.permute.xlu0 0
    %76 = vperm.xlu0 %75, %v39
    %v77 = vpop.permute.xlu0 %76
    %78 = vset.pattern.permute.xlu0 0
    %79 = vperm.xlu0 %78, %v40
    %v80 = vpop.permute.xlu0 %79
    %81 = vset.pattern.permute.xlu0 0
    %82 = vperm.xlu0 %81, %v41
    %v83 = vpop.permute.xlu0 %82
    %84 = vset.pattern.permute.xlu0 0
    %85 = vperm.xlu0 %84, %v42
    %v86 = vpop.permute.xlu0 %85
    %87 = vset.pattern.permute.xlu0 0
    %88 = vperm.xlu0 %87, %v43
    %v89 = vpop.permute.xlu0 %88
    %90 = vset.pattern.permute.xlu0 0
    %91 = vperm.xlu0 %90, %v44
    %v92 = vpop.permute.xlu0 %91
    %93 = vset.pattern.permute.xlu0 0
    %94 = vperm.xlu0 %93, %v45
    %v95 = vpop.permute.xlu0 %94
    %96 = vset.pattern.permute.xlu0 0
    %97 = vperm.xlu0 %96, %v46
    %v98 = vpop.permute.xlu0 %97
    %99 = vset.pattern.permute.xlu0 0
    %100 = vperm.xlu0 %99, %v47
    %v101 = vpop.permute.xlu0 %100
    %102 = vset.pattern.permute.xlu0 0
    %103 = vperm.xlu0 %102, %v48
    %v104 = vpop.permute.xlu0 %103
    %105 = vset.pattern.permute.xlu0 0
    %106 = vperm.xlu0 %105, %v49
    %v107 = vpop.permute.xlu0 %106
    %108 = vset.pattern.permute.xlu0 0
    %109 = vperm.xlu0 %108, %v50
    %v110 = vpop.permute.xlu0 %109
    %111 = vset.pattern.permute.xlu0 0
    %112 = vperm.xlu0 %111, %v51
    %v113 = vpop.permute.xlu0 %112
    %114 = vset.pattern.permute.xlu0 0
    %115 = vperm.xlu0 %114, %v52
    %v116 = vpop.permute.xlu0 %115
    %117 = vset.pattern.permute.xlu0 0
    %118 = vperm.xlu0 %117, %v53
    %v119 = vpop.permute.xlu0 %118
    %120 = vset.pattern.permute.xlu0 0
    %121 = vperm.xlu0 %120, %v54
    %v122 = vpop.permute.xlu0 %121
    %123 = vset.pattern.permute.xlu0 0
    %124 = vperm.xlu0 %123, %v55
    %v125 = vpop.permute.xlu0 %124
    %126 = vset.pattern.permute.xlu0 0
    %127 = vperm.xlu0 %126, %v56
    %v128 = vpop.permute.xlu0 %127
    %129 = vset.pattern.permute.xlu0 0
    %130 = vperm.xlu0 %129, %v57
    %v131 = vpop.permute.xlu0 %130
    %132 = vset.pattern.permute.xlu0 0
    %133 = vperm.xlu0 %132, %v58
    %v134 = vpop.permute.xlu0 %133
    %135 = vset.pattern.permute.xlu0 0
    %136 = vperm.xlu0 %135, %v59
    %v137 = vpop.permute.xlu0 %136
    %138 = vset.pattern.permute.xlu0 0
    %139 = vperm.xlu0 %138, %v60
    %v140 = vpop.permute.xlu0 %139
    %141 = vset.pattern.permute.xlu0 0
    %142 = vperm.xlu0 %141, %v61
    %v143 = vpop.permute.xlu0 %142
    %144 = vset.pattern.permute.xlu0 0
    %145 = vperm.xlu0 %144, %v62
    %v146 = vpop.permute.xlu0 %145
    %147 = vset.pattern.permute.xlu0 0
    %148 = vperm.xlu0 %147, %v63
    %v149 = vpop.permute.xlu0 %148
    %150 = vset.pattern.permute.xlu0 0
    %151 = vperm.xlu0 %150, %v64
    %v152 = vpop.permute.xlu0 %151
    %153 = vset.pattern.permute.xlu0 0
    %154 = vperm.xlu0 %153, %v65
    %v155 = vpop.permute.xlu0 %154
    %156 = vset.pattern.permute.xlu0 0
    %157 = vperm.xlu0 %156, %v66
    %v158 = vpop.permute.xlu0 %157
    %159 = vset.pattern.permute.xlu0 0
    %160 = vperm.xlu0 %159, %v67
    %v161 = vpop.permute.xlu0 %160
    %162 = vset.pattern.permute.xlu0 0
    %163 = vperm.xlu0 %162, %v68
    %v164 = vpop.permute.xlu0 %163
    %165 = vset.pattern.permute.xlu0 0
    %166 = vperm.xlu0 %165, %v69
    %v167 = vpop.permute.xlu0 %166
    %vm168 = vcmp.eq.s32.totalorder %v74, %v71
    %vm169 = vcmp.eq.s32.totalorder %v77, %v71
    %vm170 = vcmp.eq.s32.totalorder %v80, %v71
    %vm171 = vcmp.eq.s32.totalorder %v83, %v71
    %vm172 = vcmp.eq.s32.totalorder %v86, %v71
    %vm173 = vcmp.eq.s32.totalorder %v89, %v71
    %vm174 = vcmp.eq.s32.totalorder %v92, %v71
    %vm175 = vcmp.eq.s32.totalorder %v95, %v71
    %vm176 = vcmp.eq.s32.totalorder %v98, %v71
    %vm177 = vcmp.eq.s32.totalorder %v101, %v71
    %vm178 = vcmp.eq.s32.totalorder %v104, %v71
    %vm179 = vcmp.eq.s32.totalorder %v107, %v71
    %vm180 = vcmp.eq.s32.totalorder %v110, %v71
    %vm181 = vcmp.eq.s32.totalorder %v113, %v71
    %vm182 = vcmp.eq.s32.totalorder %v116, %v71
    %vm183 = vcmp.eq.s32.totalorder %v119, %v71
    %vm184 = vcmp.eq.s32.totalorder %v122, %v71
    %vm185 = vcmp.eq.s32.totalorder %v125, %v71
    %vm186 = vcmp.eq.s32.totalorder %v128, %v71
    %vm187 = vcmp.eq.s32.totalorder %v131, %v71
    %vm188 = vcmp.eq.s32.totalorder %v134, %v71
    %vm189 = vcmp.eq.s32.totalorder %v137, %v71
    %vm190 = vcmp.eq.s32.totalorder %v140, %v71
    %vm191 = vcmp.eq.s32.totalorder %v143, %v71
    %vm192 = vcmp.eq.s32.totalorder %v146, %v71
    %vm193 = vcmp.eq.s32.totalorder %v149, %v71
    %vm194 = vcmp.eq.s32.totalorder %v152, %v71
    %vm195 = vcmp.eq.s32.totalorder %v155, %v71
    %vm196 = vcmp.eq.s32.totalorder %v158, %v71
    %vm197 = vcmp.eq.s32.totalorder %v161, %v71
    %vm198 = vcmp.eq.s32.totalorder %v164, %v71
    %vm199 = vcmp.eq.s32.totalorder %v167, %v71
    %v200 = vsel %vm168, 1, 0
    %v201 = vsel %vm169, 1, 0
    %v202 = vsel %vm170, 1, 0
    %v203 = vsel %vm171, 1, 0
    %v204 = vsel %vm172, 1, 0
    %v205 = vsel %vm173, 1, 0
    %v206 = vsel %vm174, 1, 0
    %v207 = vsel %vm175, 1, 0
    %v208 = vsel %vm176, 1, 0
    %v209 = vsel %vm177, 1, 0
    %v210 = vsel %vm178, 1, 0
    %v211 = vsel %vm179, 1, 0
    %v212 = vsel %vm180, 1, 0
    %v213 = vsel %vm181, 1, 0
    %v214 = vsel %vm182, 1, 0
    %v215 = vsel %vm183, 1, 0
    %v216 = vsel %vm184, 1, 0
    %v217 = vsel %vm185, 1, 0
    %v218 = vsel %vm186, 1, 0
    %v219 = vsel %vm187, 1, 0
    %v220 = vsel %vm188, 1, 0
    %v221 = vsel %vm189, 1, 0
    %v222 = vsel %vm190, 1, 0
    %v223 = vsel %vm191, 1, 0
    %v224 = vsel %vm192, 1, 0
    %v225 = vsel %vm193, 1, 0
    %v226 = vsel %vm194, 1, 0
    %v227 = vsel %vm195, 1, 0
    %v228 = vsel %vm196, 1, 0
    %v229 = vsel %vm197, 1, 0
    %v230 = vsel %vm198, 1, 0
    %v231 = vsel %vm199, 1, 0
    %v232 = vcvt.s32.f32 %v200
    %v233 = vcvt.s32.f32 %v201
    %v234 = vcvt.s32.f32 %v202
    %v235 = vcvt.s32.f32 %v203
    %v236 = vcvt.s32.f32 %v204
    %v237 = vcvt.s32.f32 %v205
    %v238 = vcvt.s32.f32 %v206
    %v239 = vcvt.s32.f32 %v207
    %v240 = vcvt.s32.f32 %v208
    %v241 = vcvt.s32.f32 %v209
    %v242 = vcvt.s32.f32 %v210
    %v243 = vcvt.s32.f32 %v211
    %v244 = vcvt.s32.f32 %v212
    %v245 = vcvt.s32.f32 %v213
    %v246 = vcvt.s32.f32 %v214
    %v247 = vcvt.s32.f32 %v215
    %v248 = vcvt.s32.f32 %v216
    %v249 = vcvt.s32.f32 %v217
    %v250 = vcvt.s32.f32 %v218
    %v251 = vcvt.s32.f32 %v219
    %v252 = vcvt.s32.f32 %v220
    %v253 = vcvt.s32.f32 %v221
    %v254 = vcvt.s32.f32 %v222
    %v255 = vcvt.s32.f32 %v223
    %v256 = vcvt.s32.f32 %v224
    %v257 = vcvt.s32.f32 %v225
    %v258 = vcvt.s32.f32 %v226
    %v259 = vcvt.s32.f32 %v227
    %v260 = vcvt.s32.f32 %v228
    %v261 = vcvt.s32.f32 %v229
    %v262 = vcvt.s32.f32 %v230
    %v263 = vcvt.s32.f32 %v231
    %v264 = vld [vmem:[%s3] sm:$0xff]
    %v265 = vld [vmem:[%s3 + $0x8] sm:$0xff]
    %v266 = vld [vmem:[%s3 + $0x10] sm:$0xff]
    %v267 = vld [vmem:[%s3 + $0x18] sm:$0xff]
    %v268 = vld [vmem:[%s3 + $0x20] sm:$0xff]
    %v269 = vld [vmem:[%s3 + $0x28] sm:$0xff]
    %v270 = vld [vmem:[%s3 + $0x30] sm:$0xff]
    %v271 = vld [vmem:[%s3 + $0x38] sm:$0xff]
    %v272 = vld [vmem:[%s3 + $0x40] sm:$0xff]
    %v273 = vld [vmem:[%s3 + $0x48] sm:$0xff]
    %v274 = vld [vmem:[%s3 + $0x50] sm:$0xff]
    %v275 = vld [vmem:[%s3 + $0x58] sm:$0xff]
    %v276 = vld [vmem:[%s3 + $0x60] sm:$0xff]
    %v277 = vld [vmem:[%s3 + $0x68] sm:$0xff]
    %v278 = vld [vmem:[%s3 + $0x70] sm:$0xff]
    %v279 = vld [vmem:[%s3 + $0x78] sm:$0xff]
    %vm280 = vcmask 523264
    %v282 = vsel %vm280, %v232, 0
    %v285 = vsel %vm280, %v233, 0
    %v288 = vsel %vm280, %v234, 0
    %v291 = vsel %vm280, %v235, 0
    %v294 = vsel %vm280, %v236, 0
    %v297 = vsel %vm280, %v237, 0
    %v300 = vsel %vm280, %v238, 0
    %v303 = vsel %vm280, %v239, 0
    %v306 = vsel %vm280, %v240, 0
    %v309 = vsel %vm280, %v241, 0
    %v312 = vsel %vm280, %v242, 0
    %v315 = vsel %vm280, %v243, 0
    %v318 = vsel %vm280, %v244, 0
    %v321 = vsel %vm280, %v245, 0
    %v324 = vsel %vm280, %v246, 0
    %v327 = vsel %vm280, %v247, 0
    %v330 = vsel %vm280, %v248, 0
    %v333 = vsel %vm280, %v249, 0
    %v336 = vsel %vm280, %v250, 0
    %v339 = vsel %vm280, %v251, 0
    %v342 = vsel %vm280, %v252, 0
    %v345 = vsel %vm280, %v253, 0
    %v348 = vsel %vm280, %v254, 0
    %v351 = vsel %vm280, %v255, 0
    %v354 = vsel %vm280, %v256, 0
    %v357 = vsel %vm280, %v257, 0
    %v360 = vsel %vm280, %v258, 0
    %v363 = vsel %vm280, %v259, 0
    %v366 = vsel %vm280, %v260, 0
    %v369 = vsel %vm280, %v261, 0
    %v372 = vsel %vm280, %v262, 0
    %v375 = vsel %vm280, %v263, 0
    %377 = vmatprep.subr.mxu0 0.0
    %378 = vmatpush1.msra.mxu0 0.0
    %379 = vmatprep.subr.mxu0 0.0
    %380 = vmatpush1.msra.mxu0 0.0
    %381 = vmatprep.subr.mxu0 0.0
    %382 = vmatpush1.msra.mxu0 0.0
    %383 = vmatprep.subr.mxu0 0.0
    %384 = vmatpush1.msra.mxu0 0.0
    %385 = vmatprep.subr.mxu0 0.0
    %386 = vmatpush1.msra.mxu0 0.0
    %387 = vmatprep.subr.mxu0 0.0
    %388 = vmatpush1.msra.mxu0 0.0
    %389 = vmatprep.subr.mxu0 0.0
    %390 = vmatpush1.msra.mxu0 0.0
    %391 = vmatprep.subr.mxu0 0.0
    %392 = vmatpush1.msra.mxu0 0.0
    %393 = vmatprep.subr.mxu0 %v279
    %394 = vmatpush1.msra.mxu0 %v278
    %395 = vmatprep.subr.mxu0 %v277
    %396 = vmatpush1.msra.mxu0 %v276
    %397 = vmatprep.subr.mxu0 %v275
    %398 = vmatpush1.msra.mxu0 %v274
    %399 = vmatprep.subr.mxu0 %v273
    %400 = vmatpush1.msra.mxu0 %v272
    %401 = vmatprep.subr.mxu0 %v271
    %402 = vmatpush1.msra.mxu0 %v270
    %403 = vmatprep.subr.mxu0 %v269
    %404 = vmatpush1.msra.mxu0 %v268
    %405 = vmatprep.subr.mxu0 %v267
    %406 = vmatpush1.msra.mxu0 %v266
    %407 = vmatprep.subr.mxu0 %v265
    %408 = vmatpush1.msra.mxu0 %v264
    %409 = vmatprep.subr.mxu0 0.0
    %410 = vmatpush2.msra.mxu0 0.0
    %411 = vmatprep.subr.mxu0 0.0
    %412 = vmatpush2.msra.mxu0 0.0
    %413 = vmatprep.subr.mxu0 0.0
    %414 = vmatpush2.msra.mxu0 0.0
    %415 = vmatprep.subr.mxu0 0.0
    %416 = vmatpush2.msra.mxu0 0.0
    %417 = vmatprep.subr.mxu0 0.0
    %418 = vmatpush2.msra.mxu0 0.0
    %419 = vmatprep.subr.mxu0 0.0
    %420 = vmatpush2.msra.mxu0 0.0
    %421 = vmatprep.subr.mxu0 0.0
    %422 = vmatpush2.msra.mxu0 0.0
    %423 = vmatprep.subr.mxu0 0.0
    %424 = vmatpush2.msra.mxu0 0.0
    %425 = vmatprep.subr.mxu0 0.0
    %426 = vmatpush2.msra.mxu0 0.0
    %427 = vmatprep.subr.mxu0 0.0
    %428 = vmatpush2.msra.mxu0 0.0
    %429 = vmatprep.subr.mxu0 0.0
    %430 = vmatpush2.msra.mxu0 0.0
    %431 = vmatprep.subr.mxu0 0.0
    %432 = vmatpush2.msra.mxu0 0.0
    %433 = vmatprep.subr.mxu0 0.0
    %434 = vmatpush2.msra.mxu0 0.0
    %435 = vmatprep.subr.mxu0 0.0
    %436 = vmatpush2.msra.mxu0 0.0
    %437 = vmatprep.subr.mxu0 0.0
    %438 = vmatpush2.msra.mxu0 0.0
    %439 = vmatprep.subr.mxu0 0.0
    %440 = vmatpush2.msra.mxu0 0.0
    %441 = vmatprep.mubr.f32.mxu0 0.0
    %442 = vmatmul.mubr.f32.gmra.mxu0 %v282
    %v443 = vpop.f32.mrf.mxu0
    %v444 = vadd.f32 0.0, %v443
    %v445 = vpop.f32.mrf.mxu0
    %v446 = vadd.f32 0.0, %v445
    %447 = vmatprep.mubr.f32.mxu0 0.0
    %448 = vmatmul.mubr.f32.gmra.mxu0 %v285
    %v449 = vpop.f32.mrf.mxu0
    %v450 = vadd.f32 0.0, %v449
    %v451 = vpop.f32.mrf.mxu0
    %v452 = vadd.f32 0.0, %v451
    %453 = vmatprep.mubr.f32.mxu0 0.0
    %454 = vmatmul.mubr.f32.gmra.mxu0 %v288
    %v455 = vpop.f32.mrf.mxu0
    %v456 = vadd.f32 0.0, %v455
    %v457 = vpop.f32.mrf.mxu0
    %v458 = vadd.f32 0.0, %v457
    %459 = vmatprep.mubr.f32.mxu0 0.0
    %460 = vmatmul.mubr.f32.gmra.mxu0 %v291
    %v461 = vpop.f32.mrf.mxu0
    %v462 = vadd.f32 0.0, %v461
    %v463 = vpop.f32.mrf.mxu0
    %v464 = vadd.f32 0.0, %v463
    %465 = vmatprep.mubr.f32.mxu0 0.0
    %466 = vmatmul.mubr.f32.gmra.mxu0 %v294
    %v467 = vpop.f32.mrf.mxu0
    %v468 = vadd.f32 0.0, %v467
    %v469 = vpop.f32.mrf.mxu0
    %v470 = vadd.f32 0.0, %v469
    %471 = vmatprep.mubr.f32.mxu0 0.0
    %472 = vmatmul.mubr.f32.gmra.mxu0 %v297
    %v473 = vpop.f32.mrf.mxu0
    %v474 = vadd.f32 0.0, %v473
    %v475 = vpop.f32.mrf.mxu0
    %v476 = vadd.f32 0.0, %v475
    %477 = vmatprep.mubr.f32.mxu0 0.0
    %478 = vmatmul.mubr.f32.gmra.mxu0 %v300
    %v479 = vpop.f32.mrf.mxu0
    %v480 = vadd.f32 0.0, %v479
    %v481 = vpop.f32.mrf.mxu0
    %v482 = vadd.f32 0.0, %v481
    %483 = vmatprep.mubr.f32.mxu0 0.0
    %484 = vmatmul.mubr.f32.gmra.mxu0 %v303
    %v485 = vpop.f32.mrf.mxu0
    %v486 = vadd.f32 0.0, %v485
    %v487 = vpop.f32.mrf.mxu0
    %v488 = vadd.f32 0.0, %v487
    %489 = vmatprep.mubr.f32.mxu0 0.0
    %490 = vmatmul.mubr.f32.gmra.mxu0 %v306
    %v491 = vpop.f32.mrf.mxu0
    %v492 = vadd.f32 0.0, %v491
    %v493 = vpop.f32.mrf.mxu0
    %v494 = vadd.f32 0.0, %v493
    %495 = vmatprep.mubr.f32.mxu0 0.0
    %496 = vmatmul.mubr.f32.gmra.mxu0 %v309
    %v497 = vpop.f32.mrf.mxu0
    %v498 = vadd.f32 0.0, %v497
    %v499 = vpop.f32.mrf.mxu0
    %v500 = vadd.f32 0.0, %v499
    %501 = vmatprep.mubr.f32.mxu0 0.0
    %502 = vmatmul.mubr.f32.gmra.mxu0 %v312
    %v503 = vpop.f32.mrf.mxu0
    %v504 = vadd.f32 0.0, %v503
    %v505 = vpop.f32.mrf.mxu0
    %v506 = vadd.f32 0.0, %v505
    %507 = vmatprep.mubr.f32.mxu0 0.0
    %508 = vmatmul.mubr.f32.gmra.mxu0 %v315
    %v509 = vpop.f32.mrf.mxu0
    %v510 = vadd.f32 0.0, %v509
    %v511 = vpop.f32.mrf.mxu0
    %v512 = vadd.f32 0.0, %v511
    %513 = vmatprep.mubr.f32.mxu0 0.0
    %514 = vmatmul.mubr.f32.gmra.mxu0 %v318
    %v515 = vpop.f32.mrf.mxu0
    %v516 = vadd.f32 0.0, %v515
    %v517 = vpop.f32.mrf.mxu0
    %v518 = vadd.f32 0.0, %v517
    %519 = vmatprep.mubr.f32.mxu0 0.0
    %520 = vmatmul.mubr.f32.gmra.mxu0 %v321
    %v521 = vpop.f32.mrf.mxu0
    %v522 = vadd.f32 0.0, %v521
    %v523 = vpop.f32.mrf.mxu0
    %v524 = vadd.f32 0.0, %v523
    %525 = vmatprep.mubr.f32.mxu0 0.0
    %526 = vmatmul.mubr.f32.gmra.mxu0 %v324
    %v527 = vpop.f32.mrf.mxu0
    %v528 = vadd.f32 0.0, %v527
    %v529 = vpop.f32.mrf.mxu0
    %v530 = vadd.f32 0.0, %v529
    %531 = vmatprep.mubr.f32.mxu0 0.0
    %532 = vmatmul.mubr.f32.gmra.mxu0 %v327
    %v533 = vpop.f32.mrf.mxu0
    %v534 = vadd.f32 0.0, %v533
    %v535 = vpop.f32.mrf.mxu0
    %v536 = vadd.f32 0.0, %v535
    %537 = vmatprep.mubr.f32.mxu0 0.0
    %538 = vmatmul.mubr.f32.gmra.mxu0 %v330
    %v539 = vpop.f32.mrf.mxu0
    %v540 = vadd.f32 0.0, %v539
    %v541 = vpop.f32.mrf.mxu0
    %v542 = vadd.f32 0.0, %v541
    %543 = vmatprep.mubr.f32.mxu0 0.0
    %544 = vmatmul.mubr.f32.gmra.mxu0 %v333
    %v545 = vpop.f32.mrf.mxu0
    %v546 = vadd.f32 0.0, %v545
    %v547 = vpop.f32.mrf.mxu0
    %v548 = vadd.f32 0.0, %v547
    %549 = vmatprep.mubr.f32.mxu0 0.0
    %550 = vmatmul.mubr.f32.gmra.mxu0 %v336
    %v551 = vpop.f32.mrf.mxu0
    %v552 = vadd.f32 0.0, %v551
    %v553 = vpop.f32.mrf.mxu0
    %v554 = vadd.f32 0.0, %v553
    %555 = vmatprep.mubr.f32.mxu0 0.0
    %556 = vmatmul.mubr.f32.gmra.mxu0 %v339
    %v557 = vpop.f32.mrf.mxu0
    %v558 = vadd.f32 0.0, %v557
    %v559 = vpop.f32.mrf.mxu0
    %v560 = vadd.f32 0.0, %v559
    %561 = vmatprep.mubr.f32.mxu0 0.0
    %562 = vmatmul.mubr.f32.gmra.mxu0 %v342
    %v563 = vpop.f32.mrf.mxu0
    %v564 = vadd.f32 0.0, %v563
    %v565 = vpop.f32.mrf.mxu0
    %v566 = vadd.f32 0.0, %v565
    %567 = vmatprep.mubr.f32.mxu0 0.0
    %568 = vmatmul.mubr.f32.gmra.mxu0 %v345
    %v569 = vpop.f32.mrf.mxu0
    %v570 = vadd.f32 0.0, %v569
    %v571 = vpop.f32.mrf.mxu0
    %v572 = vadd.f32 0.0, %v571
    %573 = vmatprep.mubr.f32.mxu0 0.0
    %574 = vmatmul.mubr.f32.gmra.mxu0 %v348
    %v575 = vpop.f32.mrf.mxu0
    %v576 = vadd.f32 0.0, %v575
    %v577 = vpop.f32.mrf.mxu0
    %v578 = vadd.f32 0.0, %v577
    %579 = vmatprep.mubr.f32.mxu0 0.0
    %580 = vmatmul.mubr.f32.gmra.mxu0 %v351
    %v581 = vpop.f32.mrf.mxu0
    %v582 = vadd.f32 0.0, %v581
    %v583 = vpop.f32.mrf.mxu0
    %v584 = vadd.f32 0.0, %v583
    %585 = vmatprep.mubr.f32.mxu0 0.0
    %586 = vmatmul.mubr.f32.gmra.mxu0 %v354
    %v587 = vpop.f32.mrf.mxu0
    %v588 = vadd.f32 0.0, %v587
    %v589 = vpop.f32.mrf.mxu0
    %v590 = vadd.f32 0.0, %v589
    %591 = vmatprep.mubr.f32.mxu0 0.0
    %592 = vmatmul.mubr.f32.gmra.mxu0 %v357
    %v593 = vpop.f32.mrf.mxu0
    %v594 = vadd.f32 0.0, %v593
    %v595 = vpop.f32.mrf.mxu0
    %v596 = vadd.f32 0.0, %v595
    %597 = vmatprep.mubr.f32.mxu0 0.0
    %598 = vmatmul.mubr.f32.gmra.mxu0 %v360
    %v599 = vpop.f32.mrf.mxu0
    %v600 = vadd.f32 0.0, %v599
    %v601 = vpop.f32.mrf.mxu0
    %v602 = vadd.f32 0.0, %v601
    %603 = vmatprep.mubr.f32.mxu0 0.0
    %604 = vmatmul.mubr.f32.gmra.mxu0 %v363
    %v605 = vpop.f32.mrf.mxu0
    %v606 = vadd.f32 0.0, %v605
    %v607 = vpop.f32.mrf.mxu0
    %v608 = vadd.f32 0.0, %v607
    %609 = vmatprep.mubr.f32.mxu0 0.0
    %610 = vmatmul.mubr.f32.gmra.mxu0 %v366
    %v611 = vpop.f32.mrf.mxu0
    %v612 = vadd.f32 0.0, %v611
    %v613 = vpop.f32.mrf.mxu0
    %v614 = vadd.f32 0.0, %v613
    %615 = vmatprep.mubr.f32.mxu0 0.0
    %616 = vmatmul.mubr.f32.gmra.mxu0 %v369
    %v617 = vpop.f32.mrf.mxu0
    %v618 = vadd.f32 0.0, %v617
    %v619 = vpop.f32.mrf.mxu0
    %v620 = vadd.f32 0.0, %v619
    %621 = vmatprep.mubr.f32.mxu0 0.0
    %622 = vmatmul.mubr.f32.gmra.mxu0 %v372
    %v623 = vpop.f32.mrf.mxu0
    %v624 = vadd.f32 0.0, %v623
    %v625 = vpop.f32.mrf.mxu0
    %v626 = vadd.f32 0.0, %v625
    %627 = vmatprep.mubr.f32.mxu0 0.0
    %628 = vmatmul.mubr.f32.gmra.mxu0 %v375
    %v629 = vpop.f32.mrf.mxu0
    %v630 = vadd.f32 0.0, %v629
    %v631 = vpop.f32.mrf.mxu0
    %v632 = vadd.f32 0.0, %v631
    %633 = vdwg.mxu0
    %634 = vst [vmem:[#allocation2] sm:$0xff] %v444
    %635 = vst [vmem:[#allocation2 + $0x8] sm:$0xff] %v446
    %636 = vst [vmem:[#allocation2 + $0x10] sm:$0xff] %v450
    %637 = vst [vmem:[#allocation2 + $0x18] sm:$0xff] %v452
    %638 = vst [vmem:[#allocation2 + $0x20] sm:$0xff] %v456
    %639 = vst [vmem:[#allocation2 + $0x28] sm:$0xff] %v458
    %640 = vst [vmem:[#allocation2 + $0x30] sm:$0xff] %v462
    %641 = vst [vmem:[#allocation2 + $0x38] sm:$0xff] %v464
    %642 = vst [vmem:[#allocation2 + $0x40] sm:$0xff] %v468
    %643 = vst [vmem:[#allocation2 + $0x48] sm:$0xff] %v470
    %644 = vst [vmem:[#allocation2 + $0x50] sm:$0xff] %v474
    %645 = vst [vmem:[#allocation2 + $0x58] sm:$0xff] %v476
    %646 = vst [vmem:[#allocation2 + $0x60] sm:$0xff] %v480
    %647 = vst [vmem:[#allocation2 + $0x68] sm:$0xff] %v482
    %648 = vst [vmem:[#allocation2 + $0x70] sm:$0xff] %v486
    %649 = vst [vmem:[#allocation2 + $0x78] sm:$0xff] %v488
    %650 = vst [vmem:[#allocation2 + $0x80] sm:$0xff] %v492
    %651 = vst [vmem:[#allocation2 + $0x88] sm:$0xff] %v494
    %652 = vst [vmem:[#allocation2 + $0x90] sm:$0xff] %v498
    %653 = vst [vmem:[#allocation2 + $0x98] sm:$0xff] %v500
    %654 = vst [vmem:[#allocation2 + $0xa0] sm:$0xff] %v504
    %655 = vst [vmem:[#allocation2 + $0xa8] sm:$0xff] %v506
    %656 = vst [vmem:[#allocation2 + $0xb0] sm:$0xff] %v510
    %657 = vst [vmem:[#allocation2 + $0xb8] sm:$0xff] %v512
    %658 = vst [vmem:[#allocation2 + $0xc0] sm:$0xff] %v516
    %659 = vst [vmem:[#allocation2 + $0xc8] sm:$0xff] %v518
    %660 = vst [vmem:[#allocation2 + $0xd0] sm:$0xff] %v522
    %661 = vst [vmem:[#allocation2 + $0xd8] sm:$0xff] %v524
    %662 = vst [vmem:[#allocation2 + $0xe0] sm:$0xff] %v528
    %663 = vst [vmem:[#allocation2 + $0xe8] sm:$0xff] %v530
    %664 = vst [vmem:[#allocation2 + $0xf0] sm:$0xff] %v534
    %665 = vst [vmem:[#allocation2 + $0xf8] sm:$0xff] %v536
    %666 = vst [vmem:[#allocation2 + $0x100] sm:$0xff] %v540
    %667 = vst [vmem:[#allocation2 + $0x108] sm:$0xff] %v542
    %668 = vst [vmem:[#allocation2 + $0x110] sm:$0xff] %v546
    %669 = vst [vmem:[#allocation2 + $0x118] sm:$0xff] %v548
    %670 = vst [vmem:[#allocation2 + $0x120] sm:$0xff] %v552
    %671 = vst [vmem:[#allocation2 + $0x128] sm:$0xff] %v554
    %672 = vst [vmem:[#allocation2 + $0x130] sm:$0xff] %v558
    %673 = vst [vmem:[#allocation2 + $0x138] sm:$0xff] %v560
    %674 = vst [vmem:[#allocation2 + $0x140] sm:$0xff] %v564
    %675 = vst [vmem:[#allocation2 + $0x148] sm:$0xff] %v566
    %676 = vst [vmem:[#allocation2 + $0x150] sm:$0xff] %v570
    %677 = vst [vmem:[#allocation2 + $0x158] sm:$0xff] %v572
    %678 = vst [vmem:[#allocation2 + $0x160] sm:$0xff] %v576
    %679 = vst [vmem:[#allocation2 + $0x168] sm:$0xff] %v578
    %680 = vst [vmem:[#allocation2 + $0x170] sm:$0xff] %v582
    %681 = vst [vmem:[#allocation2 + $0x178] sm:$0xff] %v584
    %682 = vst [vmem:[#allocation2 + $0x180] sm:$0xff] %v588
    %683 = vst [vmem:[#allocation2 + $0x188] sm:$0xff] %v590
    %684 = vst [vmem:[#allocation2 + $0x190] sm:$0xff] %v594
    %685 = vst [vmem:[#allocation2 + $0x198] sm:$0xff] %v596
    %686 = vst [vmem:[#allocation2 + $0x1a0] sm:$0xff] %v600
    %687 = vst [vmem:[#allocation2 + $0x1a8] sm:$0xff] %v602
    %688 = vst [vmem:[#allocation2 + $0x1b0] sm:$0xff] %v606
    %689 = vst [vmem:[#allocation2 + $0x1b8] sm:$0xff] %v608
    %690 = vst [vmem:[#allocation2 + $0x1c0] sm:$0xff] %v612
    %691 = vst [vmem:[#allocation2 + $0x1c8] sm:$0xff] %v614
    %692 = vst [vmem:[#allocation2 + $0x1d0] sm:$0xff] %v618
    %693 = vst [vmem:[#allocation2 + $0x1d8] sm:$0xff] %v620
    %694 = vst [vmem:[#allocation2 + $0x1e0] sm:$0xff] %v624
    %695 = vst [vmem:[#allocation2 + $0x1e8] sm:$0xff] %v626
    %696 = vst [vmem:[#allocation2 + $0x1f0] sm:$0xff] %v630
    %697 = vst [vmem:[#allocation2 + $0x1f8] sm:$0xff] %v632
    %v698 = vld [vmem:[%s4] sm:$0xff]
    %v699 = vld [vmem:[%s4 + $0x8] sm:$0xff]
    %v700 = vld [vmem:[%s4 + $0x10] sm:$0xff]
    %v701 = vld [vmem:[%s4 + $0x18] sm:$0xff]
    %v702 = vld [vmem:[%s4 + $0x20] sm:$0xff]
    %v703 = vld [vmem:[%s4 + $0x28] sm:$0xff]
    %v704 = vld [vmem:[%s4 + $0x30] sm:$0xff]
    %v705 = vld [vmem:[%s4 + $0x38] sm:$0xff]
    %v706 = vld [vmem:[%s4 + $0x40] sm:$0xff]
    %v707 = vld [vmem:[%s4 + $0x48] sm:$0xff]
    %v708 = vld [vmem:[%s4 + $0x50] sm:$0xff]
    %v709 = vld [vmem:[%s4 + $0x58] sm:$0xff]
    %v710 = vld [vmem:[%s4 + $0x60] sm:$0xff]
    %v711 = vld [vmem:[%s4 + $0x68] sm:$0xff]
    %v712 = vld [vmem:[%s4 + $0x70] sm:$0xff]
    %v713 = vld [vmem:[%s4 + $0x78] sm:$0xff]
    %714 = vmatprep.subr.mxu0 0.0
    %715 = vmatpush1.msra.mxu0 0.0
    %716 = vmatprep.subr.mxu0 0.0
    %717 = vmatpush1.msra.mxu0 0.0
    %718 = vmatprep.subr.mxu0 0.0
    %719 = vmatpush1.msra.mxu0 0.0
    %720 = vmatprep.subr.mxu0 0.0
    %721 = vmatpush1.msra.mxu0 0.0
    %722 = vmatprep.subr.mxu0 0.0
    %723 = vmatpush1.msra.mxu0 0.0
    %724 = vmatprep.subr.mxu0 0.0
    %725 = vmatpush1.msra.mxu0 0.0
    %726 = vmatprep.subr.mxu0 0.0
    %727 = vmatpush1.msra.mxu0 0.0
    %728 = vmatprep.subr.mxu0 0.0
    %729 = vmatpush1.msra.mxu0 0.0
    %730 = vmatprep.subr.mxu0 %v713
    %731 = vmatpush1.msra.mxu0 %v712
    %732 = vmatprep.subr.mxu0 %v711
    %733 = vmatpush1.msra.mxu0 %v710
    %734 = vmatprep.subr.mxu0 %v709
    %735 = vmatpush1.msra.mxu0 %v708
    %736 = vmatprep.subr.mxu0 %v707
    %737 = vmatpush1.msra.mxu0 %v706
    %738 = vmatprep.subr.mxu0 %v705
    %739 = vmatpush1.msra.mxu0 %v704
    %740 = vmatprep.subr.mxu0 %v703
    %741 = vmatpush1.msra.mxu0 %v702
    %742 = vmatprep.subr.mxu0 %v701
    %743 = vmatpush1.msra.mxu0 %v700
    %744 = vmatprep.subr.mxu0 %v699
    %745 = vmatpush1.msra.mxu0 %v698
    %746 = vmatprep.subr.mxu0 0.0
    %747 = vmatpush2.msra.mxu0 0.0
    %748 = vmatprep.subr.mxu0 0.0
    %749 = vmatpush2.msra.mxu0 0.0
    %750 = vmatprep.subr.mxu0 0.0
    %751 = vmatpush2.msra.mxu0 0.0
    %752 = vmatprep.subr.mxu0 0.0
    %753 = vmatpush2.msra.mxu0 0.0
    %754 = vmatprep.subr.mxu0 0.0
    %755 = vmatpush2.msra.mxu0 0.0
    %756 = vmatprep.subr.mxu0 0.0
    %757 = vmatpush2.msra.mxu0 0.0
    %758 = vmatprep.subr.mxu0 0.0
    %759 = vmatpush2.msra.mxu0 0.0
    %760 = vmatprep.subr.mxu0 0.0
    %761 = vmatpush2.msra.mxu0 0.0
    %762 = vmatprep.subr.mxu0 0.0
    %763 = vmatpush2.msra.mxu0 0.0
    %764 = vmatprep.subr.mxu0 0.0
    %765 = vmatpush2.msra.mxu0 0.0
    %766 = vmatprep.subr.mxu0 0.0
    %767 = vmatpush2.msra.mxu0 0.0
    %768 = vmatprep.subr.mxu0 0.0
    %769 = vmatpush2.msra.mxu0 0.0
    %770 = vmatprep.subr.mxu0 0.0
    %771 = vmatpush2.msra.mxu0 0.0
    %772 = vmatprep.subr.mxu0 0.0
    %773 = vmatpush2.msra.mxu0 0.0
    %774 = vmatprep.subr.mxu0 0.0
    %775 = vmatpush2.msra.mxu0 0.0
    %776 = vmatprep.subr.mxu0 0.0
    %777 = vmatpush2.msra.mxu0 0.0
    %778 = vmatprep.mubr.f32.mxu0 0.0
    %779 = vmatmul.mubr.f32.gmra.mxu0 %v282
    %v780 = vpop.f32.mrf.mxu0
    %v781 = vadd.f32 0.0, %v780
    %v782 = vpop.f32.mrf.mxu0
    %v783 = vadd.f32 0.0, %v782
    %784 = vmatprep.mubr.f32.mxu0 0.0
    %785 = vmatmul.mubr.f32.gmra.mxu0 %v285
    %v786 = vpop.f32.mrf.mxu0
    %v787 = vadd.f32 0.0, %v786
    %v788 = vpop.f32.mrf.mxu0
    %v789 = vadd.f32 0.0, %v788
    %790 = vmatprep.mubr.f32.mxu0 0.0
    %791 = vmatmul.mubr.f32.gmra.mxu0 %v288
    %v792 = vpop.f32.mrf.mxu0
    %v793 = vadd.f32 0.0, %v792
    %v794 = vpop.f32.mrf.mxu0
    %v795 = vadd.f32 0.0, %v794
    %796 = vmatprep.mubr.f32.mxu0 0.0
    %797 = vmatmul.mubr.f32.gmra.mxu0 %v291
    %v798 = vpop.f32.mrf.mxu0
    %v799 = vadd.f32 0.0, %v798
    %v800 = vpop.f32.mrf.mxu0
    %v801 = vadd.f32 0.0, %v800
    %802 = vmatprep.mubr.f32.mxu0 0.0
    %803 = vmatmul.mubr.f32.gmra.mxu0 %v294
    %v804 = vpop.f32.mrf.mxu0
    %v805 = vadd.f32 0.0, %v804
    %v806 = vpop.f32.mrf.mxu0
    %v807 = vadd.f32 0.0, %v806
    %808 = vmatprep.mubr.f32.mxu0 0.0
    %809 = vmatmul.mubr.f32.gmra.mxu0 %v297
    %v810 = vpop.f32.mrf.mxu0
    %v811 = vadd.f32 0.0, %v810
    %v812 = vpop.f32.mrf.mxu0
    %v813 = vadd.f32 0.0, %v812
    %814 = vmatprep.mubr.f32.mxu0 0.0
    %815 = vmatmul.mubr.f32.gmra.mxu0 %v300
    %v816 = vpop.f32.mrf.mxu0
    %v817 = vadd.f32 0.0, %v816
    %v818 = vpop.f32.mrf.mxu0
    %v819 = vadd.f32 0.0, %v818
    %820 = vmatprep.mubr.f32.mxu0 0.0
    %821 = vmatmul.mubr.f32.gmra.mxu0 %v303
    %v822 = vpop.f32.mrf.mxu0
    %v823 = vadd.f32 0.0, %v822
    %v824 = vpop.f32.mrf.mxu0
    %v825 = vadd.f32 0.0, %v824
    %826 = vmatprep.mubr.f32.mxu0 0.0
    %827 = vmatmul.mubr.f32.gmra.mxu0 %v306
    %v828 = vpop.f32.mrf.mxu0
    %v829 = vadd.f32 0.0, %v828
    %v830 = vpop.f32.mrf.mxu0
    %v831 = vadd.f32 0.0, %v830
    %832 = vmatprep.mubr.f32.mxu0 0.0
    %833 = vmatmul.mubr.f32.gmra.mxu0 %v309
    %v834 = vpop.f32.mrf.mxu0
    %v835 = vadd.f32 0.0, %v834
    %v836 = vpop.f32.mrf.mxu0
    %v837 = vadd.f32 0.0, %v836
    %838 = vmatprep.mubr.f32.mxu0 0.0
    %839 = vmatmul.mubr.f32.gmra.mxu0 %v312
    %v840 = vpop.f32.mrf.mxu0
    %v841 = vadd.f32 0.0, %v840
    %v842 = vpop.f32.mrf.mxu0
    %v843 = vadd.f32 0.0, %v842
    %844 = vmatprep.mubr.f32.mxu0 0.0
    %845 = vmatmul.mubr.f32.gmra.mxu0 %v315
    %v846 = vpop.f32.mrf.mxu0
    %v847 = vadd.f32 0.0, %v846
    %v848 = vpop.f32.mrf.mxu0
    %v849 = vadd.f32 0.0, %v848
    %850 = vmatprep.mubr.f32.mxu0 0.0
    %851 = vmatmul.mubr.f32.gmra.mxu0 %v318
    %v852 = vpop.f32.mrf.mxu0
    %v853 = vadd.f32 0.0, %v852
    %v854 = vpop.f32.mrf.mxu0
    %v855 = vadd.f32 0.0, %v854
    %856 = vmatprep.mubr.f32.mxu0 0.0
    %857 = vmatmul.mubr.f32.gmra.mxu0 %v321
    %v858 = vpop.f32.mrf.mxu0
    %v859 = vadd.f32 0.0, %v858
    %v860 = vpop.f32.mrf.mxu0
    %v861 = vadd.f32 0.0, %v860
    %862 = vmatprep.mubr.f32.mxu0 0.0
    %863 = vmatmul.mubr.f32.gmra.mxu0 %v324
    %v864 = vpop.f32.mrf.mxu0
    %v865 = vadd.f32 0.0, %v864
    %v866 = vpop.f32.mrf.mxu0
    %v867 = vadd.f32 0.0, %v866
    %868 = vmatprep.mubr.f32.mxu0 0.0
    %869 = vmatmul.mubr.f32.gmra.mxu0 %v327
    %v870 = vpop.f32.mrf.mxu0
    %v871 = vadd.f32 0.0, %v870
    %v872 = vpop.f32.mrf.mxu0
    %v873 = vadd.f32 0.0, %v872
    %874 = vmatprep.mubr.f32.mxu0 0.0
    %875 = vmatmul.mubr.f32.gmra.mxu0 %v330
    %v876 = vpop.f32.mrf.mxu0
    %v877 = vadd.f32 0.0, %v876
    %v878 = vpop.f32.mrf.mxu0
    %v879 = vadd.f32 0.0, %v878
    %880 = vmatprep.mubr.f32.mxu0 0.0
    %881 = vmatmul.mubr.f32.gmra.mxu0 %v333
    %v882 = vpop.f32.mrf.mxu0
    %v883 = vadd.f32 0.0, %v882
    %v884 = vpop.f32.mrf.mxu0
    %v885 = vadd.f32 0.0, %v884
    %886 = vmatprep.mubr.f32.mxu0 0.0
    %887 = vmatmul.mubr.f32.gmra.mxu0 %v336
    %v888 = vpop.f32.mrf.mxu0
    %v889 = vadd.f32 0.0, %v888
    %v890 = vpop.f32.mrf.mxu0
    %v891 = vadd.f32 0.0, %v890
    %892 = vmatprep.mubr.f32.mxu0 0.0
    %893 = vmatmul.mubr.f32.gmra.mxu0 %v339
    %v894 = vpop.f32.mrf.mxu0
    %v895 = vadd.f32 0.0, %v894
    %v896 = vpop.f32.mrf.mxu0
    %v897 = vadd.f32 0.0, %v896
    %898 = vmatprep.mubr.f32.mxu0 0.0
    %899 = vmatmul.mubr.f32.gmra.mxu0 %v342
    %v900 = vpop.f32.mrf.mxu0
    %v901 = vadd.f32 0.0, %v900
    %v902 = vpop.f32.mrf.mxu0
    %v903 = vadd.f32 0.0, %v902
    %904 = vmatprep.mubr.f32.mxu0 0.0
    %905 = vmatmul.mubr.f32.gmra.mxu0 %v345
    %v906 = vpop.f32.mrf.mxu0
    %v907 = vadd.f32 0.0, %v906
    %v908 = vpop.f32.mrf.mxu0
    %v909 = vadd.f32 0.0, %v908
    %910 = vmatprep.mubr.f32.mxu0 0.0
    %911 = vmatmul.mubr.f32.gmra.mxu0 %v348
    %v912 = vpop.f32.mrf.mxu0
    %v913 = vadd.f32 0.0, %v912
    %v914 = vpop.f32.mrf.mxu0
    %v915 = vadd.f32 0.0, %v914
    %916 = vmatprep.mubr.f32.mxu0 0.0
    %917 = vmatmul.mubr.f32.gmra.mxu0 %v351
    %v918 = vpop.f32.mrf.mxu0
    %v919 = vadd.f32 0.0, %v918
    %v920 = vpop.f32.mrf.mxu0
    %v921 = vadd.f32 0.0, %v920
    %922 = vmatprep.mubr.f32.mxu0 0.0
    %923 = vmatmul.mubr.f32.gmra.mxu0 %v354
    %v924 = vpop.f32.mrf.mxu0
    %v925 = vadd.f32 0.0, %v924
    %v926 = vpop.f32.mrf.mxu0
    %v927 = vadd.f32 0.0, %v926
    %928 = vmatprep.mubr.f32.mxu0 0.0
    %929 = vmatmul.mubr.f32.gmra.mxu0 %v357
    %v930 = vpop.f32.mrf.mxu0
    %v931 = vadd.f32 0.0, %v930
    %v932 = vpop.f32.mrf.mxu0
    %v933 = vadd.f32 0.0, %v932
    %934 = vmatprep.mubr.f32.mxu0 0.0
    %935 = vmatmul.mubr.f32.gmra.mxu0 %v360
    %v936 = vpop.f32.mrf.mxu0
    %v937 = vadd.f32 0.0, %v936
    %v938 = vpop.f32.mrf.mxu0
    %v939 = vadd.f32 0.0, %v938
    %940 = vmatprep.mubr.f32.mxu0 0.0
    %941 = vmatmul.mubr.f32.gmra.mxu0 %v363
    %v942 = vpop.f32.mrf.mxu0
    %v943 = vadd.f32 0.0, %v942
    %v944 = vpop.f32.mrf.mxu0
    %v945 = vadd.f32 0.0, %v944
    %946 = vmatprep.mubr.f32.mxu0 0.0
    %947 = vmatmul.mubr.f32.gmra.mxu0 %v366
    %v948 = vpop.f32.mrf.mxu0
    %v949 = vadd.f32 0.0, %v948
    %v950 = vpop.f32.mrf.mxu0
    %v951 = vadd.f32 0.0, %v950
    %952 = vmatprep.mubr.f32.mxu0 0.0
    %953 = vmatmul.mubr.f32.gmra.mxu0 %v369
    %v954 = vpop.f32.mrf.mxu0
    %v955 = vadd.f32 0.0, %v954
    %v956 = vpop.f32.mrf.mxu0
    %v957 = vadd.f32 0.0, %v956
    %958 = vmatprep.mubr.f32.mxu0 0.0
    %959 = vmatmul.mubr.f32.gmra.mxu0 %v372
    %v960 = vpop.f32.mrf.mxu0
    %v961 = vadd.f32 0.0, %v960
    %v962 = vpop.f32.mrf.mxu0
    %v963 = vadd.f32 0.0, %v962
    %964 = vmatprep.mubr.f32.mxu0 0.0
    %965 = vmatmul.mubr.f32.gmra.mxu0 %v375
    %v966 = vpop.f32.mrf.mxu0
    %v967 = vadd.f32 0.0, %v966
    %v968 = vpop.f32.mrf.mxu0
    %v969 = vadd.f32 0.0, %v968
    %970 = vdwg.mxu0
    %971 = vst [vmem:[#allocation3] sm:$0xff] %v781
    %972 = vst [vmem:[#allocation3 + $0x8] sm:$0xff] %v783
    %973 = vst [vmem:[#allocation3 + $0x10] sm:$0xff] %v787
    %974 = vst [vmem:[#allocation3 + $0x18] sm:$0xff] %v789
    %975 = vst [vmem:[#allocation3 + $0x20] sm:$0xff] %v793
    %976 = vst [vmem:[#allocation3 + $0x28] sm:$0xff] %v795
    %977 = vst [vmem:[#allocation3 + $0x30] sm:$0xff] %v799
    %978 = vst [vmem:[#allocation3 + $0x38] sm:$0xff] %v801
    %979 = vst [vmem:[#allocation3 + $0x40] sm:$0xff] %v805
    %980 = vst [vmem:[#allocation3 + $0x48] sm:$0xff] %v807
    %981 = vst [vmem:[#allocation3 + $0x50] sm:$0xff] %v811
    %982 = vst [vmem:[#allocation3 + $0x58] sm:$0xff] %v813
    %983 = vst [vmem:[#allocation3 + $0x60] sm:$0xff] %v817
    %984 = vst [vmem:[#allocation3 + $0x68] sm:$0xff] %v819
    %985 = vst [vmem:[#allocation3 + $0x70] sm:$0xff] %v823
    %986 = vst [vmem:[#allocation3 + $0x78] sm:$0xff] %v825
    %987 = vst [vmem:[#allocation3 + $0x80] sm:$0xff] %v829
    %988 = vst [vmem:[#allocation3 + $0x88] sm:$0xff] %v831
    %989 = vst [vmem:[#allocation3 + $0x90] sm:$0xff] %v835
    %990 = vst [vmem:[#allocation3 + $0x98] sm:$0xff] %v837
    %991 = vst [vmem:[#allocation3 + $0xa0] sm:$0xff] %v841
    %992 = vst [vmem:[#allocation3 + $0xa8] sm:$0xff] %v843
    %993 = vst [vmem:[#allocation3 + $0xb0] sm:$0xff] %v847
    %994 = vst [vmem:[#allocation3 + $0xb8] sm:$0xff] %v849
    %995 = vst [vmem:[#allocation3 + $0xc0] sm:$0xff] %v853
    %996 = vst [vmem:[#allocation3 + $0xc8] sm:$0xff] %v855
    %997 = vst [vmem:[#allocation3 + $0xd0] sm:$0xff] %v859
    %998 = vst [vmem:[#allocation3 + $0xd8] sm:$0xff] %v861
    %999 = vst [vmem:[#allocation3 + $0xe0] sm:$0xff] %v865
    %1000 = vst [vmem:[#allocation3 + $0xe8] sm:$0xff] %v867
    %1001 = vst [vmem:[#allocation3 + $0xf0] sm:$0xff] %v871
    %1002 = vst [vmem:[#allocation3 + $0xf8] sm:$0xff] %v873
    %1003 = vst [vmem:[#allocation3 + $0x100] sm:$0xff] %v877
    %1004 = vst [vmem:[#allocation3 + $0x108] sm:$0xff] %v879
    %1005 = vst [vmem:[#allocation3 + $0x110] sm:$0xff] %v883
    %1006 = vst [vmem:[#allocation3 + $0x118] sm:$0xff] %v885
    %1007 = vst [vmem:[#allocation3 + $0x120] sm:$0xff] %v889
    %1008 = vst [vmem:[#allocation3 + $0x128] sm:$0xff] %v891
    %1009 = vst [vmem:[#allocation3 + $0x130] sm:$0xff] %v895
    %1010 = vst [vmem:[#allocation3 + $0x138] sm:$0xff] %v897
    %1011 = vst [vmem:[#allocation3 + $0x140] sm:$0xff] %v901
    %1012 = vst [vmem:[#allocation3 + $0x148] sm:$0xff] %v903
    %1013 = vst [vmem:[#allocation3 + $0x150] sm:$0xff] %v907
    %1014 = vst [vmem:[#allocation3 + $0x158] sm:$0xff] %v909
    %1015 = vst [vmem:[#allocation3 + $0x160] sm:$0xff] %v913
    %1016 = vst [vmem:[#allocation3 + $0x168] sm:$0xff] %v915
    %1017 = vst [vmem:[#allocation3 + $0x170] sm:$0xff] %v919
    %1018 = vst [vmem:[#allocation3 + $0x178] sm:$0xff] %v921
    %1019 = vst [vmem:[#allocation3 + $0x180] sm:$0xff] %v925
    %1020 = vst [vmem:[#allocation3 + $0x188] sm:$0xff] %v927
    %1021 = vst [vmem:[#allocation3 + $0x190] sm:$0xff] %v931
    %1022 = vst [vmem:[#allocation3 + $0x198] sm:$0xff] %v933
    %1023 = vst [vmem:[#allocation3 + $0x1a0] sm:$0xff] %v937
    %1024 = vst [vmem:[#allocation3 + $0x1a8] sm:$0xff] %v939
    %1025 = vst [vmem:[#allocation3 + $0x1b0] sm:$0xff] %v943
    %1026 = vst [vmem:[#allocation3 + $0x1b8] sm:$0xff] %v945
    %1027 = vst [vmem:[#allocation3 + $0x1c0] sm:$0xff] %v949
    %1028 = vst [vmem:[#allocation3 + $0x1c8] sm:$0xff] %v951
    %1029 = vst [vmem:[#allocation3 + $0x1d0] sm:$0xff] %v955
    %1030 = vst [vmem:[#allocation3 + $0x1d8] sm:$0xff] %v957
    %1031 = vst [vmem:[#allocation3 + $0x1e0] sm:$0xff] %v961
    %1032 = vst [vmem:[#allocation3 + $0x1e8] sm:$0xff] %v963
    %1033 = vst [vmem:[#allocation3 + $0x1f0] sm:$0xff] %v967
    %1034 = vst [vmem:[#allocation3 + $0x1f8] sm:$0xff] %v969
    %v1035 = vld [vmem:[%s2] sm:$0xff]
    %v1036 = vld [vmem:[%s2 + $0x8] sm:$0xff]
    %1037 = vset.pattern.permute.xlu0 0
    %1038 = vperm.xlu0 %1037, %v1035
    %v1039 = vpop.permute.xlu0 %1038
    %1040 = vset.pattern.permute.xlu0 0
    %1041 = vperm.xlu0 %1040, %v1036
    %v1042 = vpop.permute.xlu0 %1041
    %vm1043 = vcmp.gt.s32.totalorder %v1039, 0
    %vm1044 = vcmp.gt.s32.totalorder %v1042, 0
    %vm1045 = vcmp.gt.s32.totalorder %v1039, 1
    %vm1046 = vcmp.gt.s32.totalorder %v1042, 1
    %vm1047 = vcmp.gt.s32.totalorder %v1039, 2
    %vm1048 = vcmp.gt.s32.totalorder %v1042, 2
    %vm1049 = vcmp.gt.s32.totalorder %v1039, 3
    %vm1050 = vcmp.gt.s32.totalorder %v1042, 3
    %vm1051 = vcmp.gt.s32.totalorder %v1039, 4
    %vm1052 = vcmp.gt.s32.totalorder %v1042, 4
    %vm1053 = vcmp.gt.s32.totalorder %v1039, 5
    %vm1054 = vcmp.gt.s32.totalorder %v1042, 5
    %vm1055 = vcmp.gt.s32.totalorder %v1039, 6
    %vm1056 = vcmp.gt.s32.totalorder %v1042, 6
    %vm1057 = vcmp.gt.s32.totalorder %v1039, 7
    %vm1058 = vcmp.gt.s32.totalorder %v1042, 7
    %vm1059 = vcmp.gt.s32.totalorder %v1039, 8
    %vm1060 = vcmp.gt.s32.totalorder %v1042, 8
    %vm1061 = vcmp.gt.s32.totalorder %v1039, 9
    %vm1062 = vcmp.gt.s32.totalorder %v1042, 9
    %vm1063 = vcmp.gt.s32.totalorder %v1039, 10
    %vm1064 = vcmp.gt.s32.totalorder %v1042, 10
    %vm1065 = vcmp.gt.s32.totalorder %v1039, 11
    %vm1066 = vcmp.gt.s32.totalorder %v1042, 11
    %vm1067 = vcmp.gt.s32.totalorder %v1039, 12
    %vm1068 = vcmp.gt.s32.totalorder %v1042, 12
    %vm1069 = vcmp.gt.s32.totalorder %v1039, 13
    %vm1070 = vcmp.gt.s32.totalorder %v1042, 13
    %vm1071 = vcmp.gt.s32.totalorder %v1039, 14
    %vm1072 = vcmp.gt.s32.totalorder %v1042, 14
    %vm1073 = vcmp.gt.s32.totalorder %v1039, 15
    %vm1074 = vcmp.gt.s32.totalorder %v1042, 15
    %v1075 = vsel %vm1043, 1, 0
    %v1076 = vsel %vm1044, 1, 0
    %v1077 = vsel %vm1045, 1, 0
    %v1078 = vsel %vm1046, 1, 0
    %v1079 = vsel %vm1047, 1, 0
    %v1080 = vsel %vm1048, 1, 0
    %v1081 = vsel %vm1049, 1, 0
    %v1082 = vsel %vm1050, 1, 0
    %v1083 = vsel %vm1051, 1, 0
    %v1084 = vsel %vm1052, 1, 0
    %v1085 = vsel %vm1053, 1, 0
    %v1086 = vsel %vm1054, 1, 0
    %v1087 = vsel %vm1055, 1, 0
    %v1088 = vsel %vm1056, 1, 0
    %v1089 = vsel %vm1057, 1, 0
    %v1090 = vsel %vm1058, 1, 0
    %v1091 = vsel %vm1059, 1, 0
    %v1092 = vsel %vm1060, 1, 0
    %v1093 = vsel %vm1061, 1, 0
    %v1094 = vsel %vm1062, 1, 0
    %v1095 = vsel %vm1063, 1, 0
    %v1096 = vsel %vm1064, 1, 0
    %v1097 = vsel %vm1065, 1, 0
    %v1098 = vsel %vm1066, 1, 0
    %v1099 = vsel %vm1067, 1, 0
    %v1100 = vsel %vm1068, 1, 0
    %v1101 = vsel %vm1069, 1, 0
    %v1102 = vsel %vm1070, 1, 0
    %v1103 = vsel %vm1071, 1, 0
    %v1104 = vsel %vm1072, 1, 0
    %v1105 = vsel %vm1073, 1, 0
    %v1106 = vsel %vm1074, 1, 0
    %v1107 = vcvt.s32.f32 %v1075
    %v1108 = vcvt.s32.f32 %v1076
    %v1109 = vcvt.s32.f32 %v1077
    %v1110 = vcvt.s32.f32 %v1078
    %v1111 = vcvt.s32.f32 %v1079
    %v1112 = vcvt.s32.f32 %v1080
    %v1113 = vcvt.s32.f32 %v1081
    %v1114 = vcvt.s32.f32 %v1082
    %v1115 = vcvt.s32.f32 %v1083
    %v1116 = vcvt.s32.f32 %v1084
    %v1117 = vcvt.s32.f32 %v1085
    %v1118 = vcvt.s32.f32 %v1086
    %v1119 = vcvt.s32.f32 %v1087
    %v1120 = vcvt.s32.f32 %v1088
    %v1121 = vcvt.s32.f32 %v1089
    %v1122 = vcvt.s32.f32 %v1090
    %v1123 = vcvt.s32.f32 %v1091
    %v1124 = vcvt.s32.f32 %v1092
    %v1125 = vcvt.s32.f32 %v1093
    %v1126 = vcvt.s32.f32 %v1094
    %v1127 = vcvt.s32.f32 %v1095
    %v1128 = vcvt.s32.f32 %v1096
    %v1129 = vcvt.s32.f32 %v1097
    %v1130 = vcvt.s32.f32 %v1098
    %v1131 = vcvt.s32.f32 %v1099
    %v1132 = vcvt.s32.f32 %v1100
    %v1133 = vcvt.s32.f32 %v1101
    %v1134 = vcvt.s32.f32 %v1102
    %v1135 = vcvt.s32.f32 %v1103
    %v1136 = vcvt.s32.f32 %v1104
    %v1137 = vcvt.s32.f32 %v1105
    %v1138 = vcvt.s32.f32 %v1106
    %s1139 = ssub.s32 %s37, 1
    %v1140 = vstv %s1139
    %v1141 = vsub.s32 %v1140, 1
    %v1142 = vsub.s32 %v1140, 2
    %v1143 = vsub.s32 %v1140, 3
    %v1144 = vsub.s32 %v1140, 4
    %v1145 = vsub.s32 %v1140, 5
    %v1146 = vsub.s32 %v1140, 6
    %v1147 = vsub.s32 %v1140, 7
    %v1148 = vsub.s32 %v1140, 8
    %v1149 = vsub.s32 %v1140, 9
    %v1150 = vsub.s32 %v1140, 10
    %v1151 = vsub.s32 %v1140, 11
    %v1152 = vsub.s32 %v1140, 12
    %v1153 = vsub.s32 %v1140, 13
    %v1154 = vsub.s32 %v1140, 14
    %v1155 = vsub.s32 %v1140, 15
    %vm1156 = vcmp.lt.s32.totalorder %v1140, %v1039
    %vm1157 = vcmp.lt.s32.totalorder %v1140, %v1042
    %vm1158 = vcmp.lt.s32.totalorder %v1141, %v1039
    %vm1159 = vcmp.lt.s32.totalorder %v1141, %v1042
    %vm1160 = vcmp.lt.s32.totalorder %v1142, %v1039
    %vm1161 = vcmp.lt.s32.totalorder %v1142, %v1042
    %vm1162 = vcmp.lt.s32.totalorder %v1143, %v1039
    %vm1163 = vcmp.lt.s32.totalorder %v1143, %v1042
    %vm1164 = vcmp.lt.s32.totalorder %v1144, %v1039
    %vm1165 = vcmp.lt.s32.totalorder %v1144, %v1042
    %vm1166 = vcmp.lt.s32.totalorder %v1145, %v1039
    %vm1167 = vcmp.lt.s32.totalorder %v1145, %v1042
    %vm1168 = vcmp.lt.s32.totalorder %v1146, %v1039
    %vm1169 = vcmp.lt.s32.totalorder %v1146, %v1042
    %vm1170 = vcmp.lt.s32.totalorder %v1147, %v1039
    %vm1171 = vcmp.lt.s32.totalorder %v1147, %v1042
    %vm1172 = vcmp.lt.s32.totalorder %v1148, %v1039
    %vm1173 = vcmp.lt.s32.totalorder %v1148, %v1042
    %vm1174 = vcmp.lt.s32.totalorder %v1149, %v1039
    %vm1175 = vcmp.lt.s32.totalorder %v1149, %v1042
    %vm1176 = vcmp.lt.s32.totalorder %v1150, %v1039
    %vm1177 = vcmp.lt.s32.totalorder %v1150, %v1042
    %vm1178 = vcmp.lt.s32.totalorder %v1151, %v1039
    %vm1179 = vcmp.lt.s32.totalorder %v1151, %v1042
    %vm1180 = vcmp.lt.s32.totalorder %v1152, %v1039
    %vm1181 = vcmp.lt.s32.totalorder %v1152, %v1042
    %vm1182 = vcmp.lt.s32.totalorder %v1153, %v1039
    %vm1183 = vcmp.lt.s32.totalorder %v1153, %v1042
    %vm1184 = vcmp.lt.s32.totalorder %v1154, %v1039
    %vm1185 = vcmp.lt.s32.totalorder %v1154, %v1042
    %vm1186 = vcmp.lt.s32.totalorder %v1155, %v1039
    %vm1187 = vcmp.lt.s32.totalorder %v1155, %v1042
    %v1188 = vsel %vm1156, 1, 0
    %v1189 = vsel %vm1157, 1, 0
    %v1190 = vsel %vm1158, 1, 0
    %v1191 = vsel %vm1159, 1, 0
    %v1192 = vsel %vm1160, 1, 0
    %v1193 = vsel %vm1161, 1, 0
    %v1194 = vsel %vm1162, 1, 0
    %v1195 = vsel %vm1163, 1, 0
    %v1196 = vsel %vm1164, 1, 0
    %v1197 = vsel %vm1165, 1, 0
    %v1198 = vsel %vm1166, 1, 0
    %v1199 = vsel %vm1167, 1, 0
    %v1200 = vsel %vm1168, 1, 0
    %v1201 = vsel %vm1169, 1, 0
    %v1202 = vsel %vm1170, 1, 0
    %v1203 = vsel %vm1171, 1, 0
    %v1204 = vsel %vm1172, 1, 0
    %v1205 = vsel %vm1173, 1, 0
    %v1206 = vsel %vm1174, 1, 0
    %v1207 = vsel %vm1175, 1, 0
    %v1208 = vsel %vm1176, 1, 0
    %v1209 = vsel %vm1177, 1, 0
    %v1210 = vsel %vm1178, 1, 0
    %v1211 = vsel %vm1179, 1, 0
    %v1212 = vsel %vm1180, 1, 0
    %v1213 = vsel %vm1181, 1, 0
    %v1214 = vsel %vm1182, 1, 0
    %v1215 = vsel %vm1183, 1, 0
    %v1216 = vsel %vm1184, 1, 0
    %v1217 = vsel %vm1185, 1, 0
    %v1218 = vsel %vm1186, 1, 0
    %v1219 = vsel %vm1187, 1, 0
    %v1220 = vcvt.s32.f32 %v1188
    %v1221 = vcvt.s32.f32 %v1189
    %v1222 = vcvt.s32.f32 %v1190
    %v1223 = vcvt.s32.f32 %v1191
    %v1224 = vcvt.s32.f32 %v1192
    %v1225 = vcvt.s32.f32 %v1193
    %v1226 = vcvt.s32.f32 %v1194
    %v1227 = vcvt.s32.f32 %v1195
    %v1228 = vcvt.s32.f32 %v1196
    %v1229 = vcvt.s32.f32 %v1197
    %v1230 = vcvt.s32.f32 %v1198
    %v1231 = vcvt.s32.f32 %v1199
    %v1232 = vcvt.s32.f32 %v1200
    %v1233 = vcvt.s32.f32 %v1201
    %v1234 = vcvt.s32.f32 %v1202
    %v1235 = vcvt.s32.f32 %v1203
    %v1236 = vcvt.s32.f32 %v1204
    %v1237 = vcvt.s32.f32 %v1205
    %v1238 = vcvt.s32.f32 %v1206
    %v1239 = vcvt.s32.f32 %v1207
    %v1240 = vcvt.s32.f32 %v1208
    %v1241 = vcvt.s32.f32 %v1209
    %v1242 = vcvt.s32.f32 %v1210
    %v1243 = vcvt.s32.f32 %v1211
    %v1244 = vcvt.s32.f32 %v1212
    %v1245 = vcvt.s32.f32 %v1213
    %v1246 = vcvt.s32.f32 %v1214
    %v1247 = vcvt.s32.f32 %v1215
    %v1248 = vcvt.s32.f32 %v1216
    %v1249 = vcvt.s32.f32 %v1217
    %v1250 = vcvt.s32.f32 %v1218
    %v1251 = vcvt.s32.f32 %v1219
    %vm1252 = vcmask 261120
    %v1253 = vsel %vm1252, %v1107, %v1220
    %v1254 = vsel %vm1252, %v1108, %v1221
    %v1255 = vsel %vm1252, %v1109, %v1222
    %v1256 = vsel %vm1252, %v1110, %v1223
    %v1257 = vsel %vm1252, %v1111, %v1224
    %v1258 = vsel %vm1252, %v1112, %v1225
    %v1259 = vsel %vm1252, %v1113, %v1226
    %v1260 = vsel %vm1252, %v1114, %v1227
    %v1261 = vsel %vm1252, %v1115, %v1228
    %v1262 = vsel %vm1252, %v1116, %v1229
    %v1263 = vsel %vm1252, %v1117, %v1230
    %v1264 = vsel %vm1252, %v1118, %v1231
    %v1265 = vsel %vm1252, %v1119, %v1232
    %v1266 = vsel %vm1252, %v1120, %v1233
    %v1267 = vsel %vm1252, %v1121, %v1234
    %v1268 = vsel %vm1252, %v1122, %v1235
    %v1269 = vsel %vm1252, %v1123, %v1236
    %v1270 = vsel %vm1252, %v1124, %v1237
    %v1271 = vsel %vm1252, %v1125, %v1238
    %v1272 = vsel %vm1252, %v1126, %v1239
    %v1273 = vsel %vm1252, %v1127, %v1240
    %v1274 = vsel %vm1252, %v1128, %v1241
    %v1275 = vsel %vm1252, %v1129, %v1242
    %v1276 = vsel %vm1252, %v1130, %v1243
    %v1277 = vsel %vm1252, %v1131, %v1244
    %v1278 = vsel %vm1252, %v1132, %v1245
    %v1279 = vsel %vm1252, %v1133, %v1246
    %v1280 = vsel %vm1252, %v1134, %v1247
    %v1281 = vsel %vm1252, %v1135, %v1248
    %v1282 = vsel %vm1252, %v1136, %v1249
    %v1283 = vsel %vm1252, %v1137, %v1250
    %v1284 = vsel %vm1252, %v1138, %v1251
    %1285 = vst.msk [vmem:[#allocation4] sm:$0xff] %vm280, %v1253
    %1286 = vst.msk [vmem:[#allocation4 + $0x8] sm:$0xff] %vm280, %v1254
    %1287 = vst.msk [vmem:[#allocation4 + $0x10] sm:$0xff] %vm280, %v1255
    %1288 = vst.msk [vmem:[#allocation4 + $0x18] sm:$0xff] %vm280, %v1256
    %1289 = vst.msk [vmem:[#allocation4 + $0x20] sm:$0xff] %vm280, %v1257
    %1290 = vst.msk [vmem:[#allocation4 + $0x28] sm:$0xff] %vm280, %v1258
    %1291 = vst.msk [vmem:[#allocation4 + $0x30] sm:$0xff] %vm280, %v1259
    %1292 = vst.msk [vmem:[#allocation4 + $0x38] sm:$0xff] %vm280, %v1260
    %1293 = vst.msk [vmem:[#allocation4 + $0x40] sm:$0xff] %vm280, %v1261
    %1294 = vst.msk [vmem:[#allocation4 + $0x48] sm:$0xff] %vm280, %v1262
    %1295 = vst.msk [vmem:[#allocation4 + $0x50] sm:$0xff] %vm280, %v1263
    %1296 = vst.msk [vmem:[#allocation4 + $0x58] sm:$0xff] %vm280, %v1264
    %1297 = vst.msk [vmem:[#allocation4 + $0x60] sm:$0xff] %vm280, %v1265
    %1298 = vst.msk [vmem:[#allocation4 + $0x68] sm:$0xff] %vm280, %v1266
    %1299 = vst.msk [vmem:[#allocation4 + $0x70] sm:$0xff] %vm280, %v1267
    %1300 = vst.msk [vmem:[#allocation4 + $0x78] sm:$0xff] %vm280, %v1268
    %1301 = vst.msk [vmem:[#allocation4 + $0x80] sm:$0xff] %vm280, %v1269
    %1302 = vst.msk [vmem:[#allocation4 + $0x88] sm:$0xff] %vm280, %v1270
    %1303 = vst.msk [vmem:[#allocation4 + $0x90] sm:$0xff] %vm280, %v1271
    %1304 = vst.msk [vmem:[#allocation4 + $0x98] sm:$0xff] %vm280, %v1272
    %1305 = vst.msk [vmem:[#allocation4 + $0xa0] sm:$0xff] %vm280, %v1273
    %1306 = vst.msk [vmem:[#allocation4 + $0xa8] sm:$0xff] %vm280, %v1274
    %1307 = vst.msk [vmem:[#allocation4 + $0xb0] sm:$0xff] %vm280, %v1275
    %1308 = vst.msk [vmem:[#allocation4 + $0xb8] sm:$0xff] %vm280, %v1276
    %1309 = vst.msk [vmem:[#allocation4 + $0xc0] sm:$0xff] %vm280, %v1277
    %1310 = vst.msk [vmem:[#allocation4 + $0xc8] sm:$0xff] %vm280, %v1278
    %1311 = vst.msk [vmem:[#allocation4 + $0xd0] sm:$0xff] %vm280, %v1279
    %1312 = vst.msk [vmem:[#allocation4 + $0xd8] sm:$0xff] %vm280, %v1280
    %1313 = vst.msk [vmem:[#allocation4 + $0xe0] sm:$0xff] %vm280, %v1281
    %1314 = vst.msk [vmem:[#allocation4 + $0xe8] sm:$0xff] %vm280, %v1282
    %1315 = vst.msk [vmem:[#allocation4 + $0xf0] sm:$0xff] %vm280, %v1283
    %1316 = vst.msk [vmem:[#allocation4 + $0xf8] sm:$0xff] %vm280, %v1284
    %v1317 = vld [vmem:[#allocation7] sm:$0xff]
    %v1318 = vld [vmem:[#allocation7 + $0x8] sm:$0xff]
    %v1319 = vld [vmem:[#allocation7 + $0x10] sm:$0xff]
    %v1320 = vld [vmem:[#allocation7 + $0x18] sm:$0xff]
    %v1321 = vld [vmem:[#allocation7 + $0x20] sm:$0xff]
    %v1322 = vld [vmem:[#allocation7 + $0x28] sm:$0xff]
    %v1323 = vld [vmem:[#allocation7 + $0x30] sm:$0xff]
    %v1324 = vld [vmem:[#allocation7 + $0x38] sm:$0xff]
    %v1325 = vld [vmem:[#allocation7 + $0x40] sm:$0xff]
    %v1326 = vld [vmem:[#allocation7 + $0x48] sm:$0xff]
    %v1327 = vld [vmem:[#allocation7 + $0x50] sm:$0xff]
    %v1328 = vld [vmem:[#allocation7 + $0x58] sm:$0xff]
    %v1329 = vld [vmem:[#allocation7 + $0x60] sm:$0xff]
    %v1330 = vld [vmem:[#allocation7 + $0x68] sm:$0xff]
    %v1331 = vld [vmem:[#allocation7 + $0x70] sm:$0xff]
    %v1332 = vld [vmem:[#allocation7 + $0x78] sm:$0xff]
    // While loop
    $region26: #{tpu_custom_call.1} parent=1 // loop_pre_header
      _
    $region27: #{tpu_custom_call.1} parent=1 // loop_header
      %s1334 = sphi 0, %s1336
      %p1335 = scmp.ge.s32.totalorder %s1334, %s37
      %v1339 = vphi 0.0, %v1525
      %v1340 = vphi 0.0, %v1526
      %v1341 = vphi 0.0, %v1539
      %v1342 = vphi 0.0, %v1540
    $region28: #{tpu_custom_call.1} parent=1 // loop_header_branch
      %1338 = sbr.rel (%p1335) target = $region32
    $region29: #{tpu_custom_call.1} parent=1 // loop_body
      %s1343 = smul.u32 %s1334, 4
      %s1344 = smul.addr %s1343, 8
      %s1345 = scalar_lea.vmem [#allocation2], %s1344
      %v1346 = vld [vmem:[%s1345] sm:$0xff]
      %v1347 = vld [vmem:[%s1345 + $0x8] sm:$0xff]
      %v1348 = vld [vmem:[%s1345 + $0x10] sm:$0xff]
      %v1349 = vld [vmem:[%s1345 + $0x18] sm:$0xff]
      %s1350 = ssub.s32 %s1139, %s1334
      %s1351 = smul.u32 %s1350, 4
      %s1352 = smul.addr %s1351, 8
      %s1353 = scalar_lea.vmem [#allocation3], %s1352
      %v1354 = vld [vmem:[%s1353] sm:$0xff]
      %v1355 = vld [vmem:[%s1353 + $0x8] sm:$0xff]
      %v1356 = vld [vmem:[%s1353 + $0x10] sm:$0xff]
      %v1357 = vld [vmem:[%s1353 + $0x18] sm:$0xff]
      %v1358 = vadd.f32 %v1346, %v1354
      %v1359 = vadd.f32 %v1347, %v1355
      %v1360 = vadd.f32 %v1348, %v1356
      %v1361 = vadd.f32 %v1349, %v1357
      %v1363 = vsel %vm280, %v1339, 0
      %v1366 = vsel %vm280, %v1340, 0
      %1368 = vmatprep.subr.mxu0 0.0
      %1369 = vmatpush1.msra.mxu0 0.0
      %1370 = vmatprep.subr.mxu0 0.0
      %1371 = vmatpush1.msra.mxu0 0.0
      %1372 = vmatprep.subr.mxu0 0.0
      %1373 = vmatpush1.msra.mxu0 0.0
      %1374 = vmatprep.subr.mxu0 0.0
      %1375 = vmatpush1.msra.mxu0 0.0
      %1376 = vmatprep.subr.mxu0 0.0
      %1377 = vmatpush1.msra.mxu0 0.0
      %1378 = vmatprep.subr.mxu0 0.0
      %1379 = vmatpush1.msra.mxu0 0.0
      %1380 = vmatprep.subr.mxu0 0.0
      %1381 = vmatpush1.msra.mxu0 0.0
      %1382 = vmatprep.subr.mxu0 0.0
      %1383 = vmatpush1.msra.mxu0 0.0
      %1384 = vmatprep.subr.mxu0 %v1332
      %1385 = vmatpush1.msra.mxu0 %v1331
      %1386 = vmatprep.subr.mxu0 %v1330
      %1387 = vmatpush1.msra.mxu0 %v1329
      %1388 = vmatprep.subr.mxu0 %v1328
      %1389 = vmatpush1.msra.mxu0 %v1327
      %1390 = vmatprep.subr.mxu0 %v1326
      %1391 = vmatpush1.msra.mxu0 %v1325
      %1392 = vmatprep.subr.mxu0 %v1324
      %1393 = vmatpush1.msra.mxu0 %v1323
      %1394 = vmatprep.subr.mxu0 %v1322
      %1395 = vmatpush1.msra.mxu0 %v1321
      %1396 = vmatprep.subr.mxu0 %v1320
      %1397 = vmatpush1.msra.mxu0 %v1319
      %1398 = vmatprep.subr.mxu0 %v1318
      %1399 = vmatpush1.msra.mxu0 %v1317
      %1400 = vmatprep.subr.mxu0 0.0
      %1401 = vmatpush2.msra.mxu0 0.0
      %1402 = vmatprep.subr.mxu0 0.0
      %1403 = vmatpush2.msra.mxu0 0.0
      %1404 = vmatprep.subr.mxu0 0.0
      %1405 = vmatpush2.msra.mxu0 0.0
      %1406 = vmatprep.subr.mxu0 0.0
      %1407 = vmatpush2.msra.mxu0 0.0
      %1408 = vmatprep.subr.mxu0 0.0
      %1409 = vmatpush2.msra.mxu0 0.0
      %1410 = vmatprep.subr.mxu0 0.0
      %1411 = vmatpush2.msra.mxu0 0.0
      %1412 = vmatprep.subr.mxu0 0.0
      %1413 = vmatpush2.msra.mxu0 0.0
      %1414 = vmatprep.subr.mxu0 0.0
      %1415 = vmatpush2.msra.mxu0 0.0
      %1416 = vmatprep.subr.mxu0 0.0
      %1417 = vmatpush2.msra.mxu0 0.0
      %1418 = vmatprep.subr.mxu0 0.0
      %1419 = vmatpush2.msra.mxu0 0.0
      %1420 = vmatprep.subr.mxu0 0.0
      %1421 = vmatpush2.msra.mxu0 0.0
      %1422 = vmatprep.subr.mxu0 0.0
      %1423 = vmatpush2.msra.mxu0 0.0
      %1424 = vmatprep.subr.mxu0 0.0
      %1425 = vmatpush2.msra.mxu0 0.0
      %1426 = vmatprep.subr.mxu0 0.0
      %1427 = vmatpush2.msra.mxu0 0.0
      %1428 = vmatprep.subr.mxu0 0.0
      %1429 = vmatpush2.msra.mxu0 0.0
      %1430 = vmatprep.subr.mxu0 0.0
      %1431 = vmatpush2.msra.mxu0 0.0
      %1432 = vmatprep.mubr.f32.mxu0 0.0
      %1433 = vmatmul.mubr.f32.gmra.mxu0 %v1363
      %v1434 = vpop.f32.mrf.mxu0
      %v1435 = vadd.f32 0.0, %v1434
      %v1436 = vpop.f32.mrf.mxu0
      %v1437 = vadd.f32 0.0, %v1436
      %1438 = vmatprep.mubr.f32.mxu0 0.0
      %1439 = vmatmul.mubr.f32.gmra.mxu0 %v1366
      %v1440 = vpop.f32.mrf.mxu0
      %v1441 = vadd.f32 0.0, %v1440
      %v1442 = vpop.f32.mrf.mxu0
      %v1443 = vadd.f32 0.0, %v1442
      %1444 = vdwg.mxu0
      %v1445 = vadd.f32 %v1358, %v1435
      %v1446 = vadd.f32 %v1359, %v1437
      %v1447 = vadd.f32 %v1360, %v1441
      %v1448 = vadd.f32 %v1361, %v1443
      %v1449 = vxor.u32 %v1445, 2147483648
      %v1450 = vxor.u32 %v1446, 2147483648
      %v1451 = vxor.u32 %v1447, 2147483648
      %v1452 = vxor.u32 %v1448, 2147483648
      %v1453 = vmul.f32 %v1449, 1.442695
      %v1454 = vpow.pop %v1453
      %v1455 = vmul.f32 %v1450, 1.442695
      %v1456 = vpow.pop %v1455
      %v1457 = vmul.f32 %v1451, 1.442695
      %v1458 = vpow.pop %v1457
      %v1459 = vmul.f32 %v1452, 1.442695
      %v1460 = vpow.pop %v1459
      %v1461 = vadd.f32 %v1454, 1.0
      %v1462 = vadd.f32 %v1456, 1.0
      %v1463 = vadd.f32 %v1458, 1.0
      %v1464 = vadd.f32 %v1460, 1.0
      %v1465 = vrcp.pop %v1461
      %v1466 = vmul.f32 1.0, %v1465
      %v1467 = vrcp.pop %v1462
      %v1468 = vmul.f32 1.0, %v1467
      %v1469 = vrcp.pop %v1463
      %v1470 = vmul.f32 1.0, %v1469
      %v1471 = vrcp.pop %v1464
      %v1472 = vmul.f32 1.0, %v1471
      %v1473 = vtanh.pop %v1446
      %v1474 = vtanh.pop %v1448
      %1477 = vrot.lane.b32.xlu0 %v1341, 64
      %v1478 = vpop.permute.xlu0 %1477
      %1479 = vrot.lane.b32.xlu0 %v1342, 64
      %v1480 = vpop.permute.xlu0 %1479
      %v1483 = vmul.f32 %v1466, %v1478
      %v1484 = vmul.f32 %v1470, %v1480
      %1487 = vrot.lane.b32.xlu0 %v1473, 64
      %v1488 = vpop.permute.xlu0 %1487
      %1489 = vrot.lane.b32.xlu0 %v1474, 64
      %v1490 = vpop.permute.xlu0 %1489
      %v1493 = vmul.f32 %v1466, %v1488
      %v1494 = vmul.f32 %v1470, %v1490
      %1497 = vrot.lane.b32.xlu0 %v1493, 64
      %v1498 = vpop.permute.xlu0 %1497
      %1499 = vrot.lane.b32.xlu0 %v1494, 64
      %v1500 = vpop.permute.xlu0 %1499
      %v1503 = vadd.f32 %v1483, %v1498
      %v1504 = vadd.f32 %v1484, %v1500
      %v1505 = vtanh.pop %v1503
      %v1506 = vtanh.pop %v1504
      %1509 = vrot.lane.b32.xlu0 %v1505, 64
      %v1510 = vpop.permute.xlu0 %1509
      %1511 = vrot.lane.b32.xlu0 %v1506, 64
      %v1512 = vpop.permute.xlu0 %1511
      %v1515 = vmul.f32 %v1468, %v1510
      %v1516 = vmul.f32 %v1472, %v1512
      %s1517 = smul.u32 %s1334, 16
      %s1518 = scalar_lea.vmem [#allocation4], %s1517
      %v1519 = vld [vmem:[%s1518] sm:$0xff]
      %v1520 = vld [vmem:[%s1518 + $0x8] sm:$0xff]
      %v1521 = vsub.f32 %v1515, %v1339
      %v1522 = vsub.f32 %v1516, %v1340
      %v1523 = vmul.f32 %v1519, %v1521
      %v1524 = vmul.f32 %v1520, %v1522
      %v1525 = vadd.f32 %v1339, %v1523
      %v1526 = vadd.f32 %v1340, %v1524
      %v1527 = vsub.f32 %v1503, %v1478
      %v1528 = vsub.f32 %v1504, %v1480
      %1531 = vrot.lane.b32.xlu0 %v1527, 64
      %v1532 = vpop.permute.xlu0 %1531
      %1533 = vrot.lane.b32.xlu0 %v1528, 64
      %v1534 = vpop.permute.xlu0 %1533
      %v1537 = vmul.f32 %v1519, %v1532
      %v1538 = vmul.f32 %v1520, %v1534
      %v1539 = vadd.f32 %v1341, %v1537
      %v1540 = vadd.f32 %v1342, %v1538
    $region30: #{tpu_custom_call.1} parent=1 // loop_footer
      %s1336 = sadd.s32 %s1334, 1
    $region31: #{tpu_custom_call.1} parent=1 // loop_footer_branch
      %1333 = sbr.rel target = $region27
    $region32: #{tpu_custom_call.1} parent=1 // loop_exit
      _
    %1541 = vst.msk [vmem:[#allocation10] sm:$0xff] %vm280, %v1339
    %1542 = vst.msk [vmem:[#allocation10 + $0x8] sm:$0xff] %vm280, %v1340
    // Predicated region
    $region33: #{tpu_custom_call.1} parent=1 // pred_check
      _
    $region34: #{tpu_custom_call.1} parent=1 // pred_check_branch
      %1544 = sbr.rel (0) target = $region36
    $region35: #{tpu_custom_call.1} parent=1 // pred_region
      %s1546 = ssub.s32 256, 256
      %1547 = vsyncadd [#allocation9], %s1546
      %s1548 = sshll.u32 [#allocation10], 4
      %s1549 = int_to_ptr.vmem [resolvable:$true] %s1548
      %1554 = dma.vmem_to_hbm [thread:$0]  %s1549, 256, %s6, [#allocation9], 128, 128, 8
    $region36: #{tpu_custom_call.1} parent=1 // pred_fallthru
      _
    // Predicated region
    $region37: #{tpu_custom_call.1} parent=1 // pred_check
      _
    $region38: #{tpu_custom_call.1} parent=1 // pred_check_branch
      %1556 = sbr.rel (0) target = $region40
    $region39: #{tpu_custom_call.1} parent=1 // pred_region
      %1557 = dma.done [#allocation9], 256
    $region40: #{tpu_custom_call.1} parent=1 // pred_fallthru
      _
    %1558 = vsyncpa [#allocation8], 1
    %1559 = vsyncpa [#allocation9], 1

</llo_original>
